<compile_context>
chip_gen: v7x
topology: tpu7x:2x2x1
jax: 0.10.0
libtpu: 0.0.40
codegen_flags: <defaults>
</compile_context>

<pallas_src>
import math

import jax
import jax.numpy as jnp
from jax.experimental import pallas as pl
from jax.experimental.pallas import tpu as pltpu


# --------------------------------------------------------------------------- #
# Fused whole-loop Pallas kernel
# --------------------------------------------------------------------------- #
def _unipc_sampler_kernel(coef_ref, noise_ref, w_ref, b_ref, x_ref, hist_ref):
    """One grid step of the fused UniPC sampler.

    grid = (B, lane_tiles, num_steps + 1); axis 2 (steps) is sequential.
      coef_ref : SMEM (num_steps+1, 8) per-step scalars
                 [inv_rk, a0, a1, p_d1, c_m0, c_d1, c_mt, sigma0]
      noise_ref: (C, TN) raw noise tile (sigma0 scaling happens in-kernel)
      w_ref    : (C, C)  per-step folded weight  W'_t = cv_t*W + cx_t*I
      b_ref    : (C, 1)  per-step folded bias    b'_t = cv_t*b
      x_ref    : (C, TN) output; block index constant along the step axis, so x
                 stays VMEM-resident and hits HBM once per tile.
      hist_ref : (2, C, TN) ping-pong model history (model_prev_list)
    """
    t = pl.program_id(2)
    last = pl.num_programs(2) - 1

    def model_fn(x):
        # Synthetic affine denoiser (1x1 conv == channel mix) with the UniPC
        # x0/eps-prediction combine folded into W'_t / b'_t host-side, so one
        # MXU matmul does the whole model eval (VPU only sees the +bias).
        # TODO(synk): an arbitrary denoiser nn.Module (fn/net in the PyTorch
        # module) cannot be fused here; this affine stand-in keeps it fusable.
        return jnp.dot(w_ref[...], x,
                       preferred_element_type=jnp.float32,
                       precision=jax.lax.Precision.HIGHEST) + b_ref[...]

    @pl.when(t == 0)
    def _init():
        # x <- sigmas[0]*noise ; model_prev_list = [model_fn(x, lambds[0])]
        x = coef_ref[0, 7] * noise_ref[...]
        x_ref[...] = x
        m = model_fn(x)
        hist_ref[0] = m
        hist_ref[1] = m            # seed older slot (inv_rk == 0 until it's real)

    @pl.when(t > 0)
    def _step():
        inv_rk = coef_ref[t, 0]
        a0 = coef_ref[t, 1]
        a1 = coef_ref[t, 2]
        p_d1 = coef_ref[t, 3]

        m0_slot = (t - 1) & 1      # model_prev_list[-1]  (written by step t-1)
        m1_slot = t & 1            # model_prev_list[-2]  (overwritten below)

        x = x_ref[...]
        m0 = hist_ref[m0_slot]
        d1 = inv_rk * (hist_ref[m1_slot] - m0)   # D1; inv_rk == 0 when order == 1
        ax = a0 * x                              # shared by predictor & corrector
        x_pred = ax + a1 * m0 + p_d1 * d1        # UniPC-bh2 predictor

        @pl.when(t < last)
        def _corrector():
            c_m0 = coef_ref[t, 4]
            c_d1 = coef_ref[t, 5]
            c_mt = coef_ref[t, 6]
            model_t = model_fn(x_pred)           # corrector model evaluation
            x_ref[...] = ax + c_m0 * m0 + c_d1 * d1 + c_mt * model_t
            hist_ref[m1_slot] = model_t          # ping-pong: store only the new model

        @pl.when(t == last)
        def _final():
            # use_corrector=False on the last step: its model eval is dead in the
            # reference, so skip it and fuse the clamp into the predictor write.
            x_ref[...] = jnp.clip(x_pred, -1.0, 1.0)


def _plan_lanes(hw, c, vmem_budget_bytes=24 << 20, max_tile=32768):
    """Pick the lane tile TN and a (possibly padded) lane extent.

    Per-tile VMEM ~ 6 live (C, TN) f32 buffers (double-buffered in/out + 2-slot
    history), so TN is capped by both `max_tile` (grid-overhead sweet spot) and
    a VMEM budget that still fits v7x's smaller VMEM.
    """
    cap = max(128, min(max_tile, vmem_budget_bytes // (6 * c * 4)))
    if hw <= cap:
        return hw, hw                      # single full-extent tile (always legal)
    tn = (cap // 128) * 128
    while tn >= 128:                       # largest 128-multiple divisor <= cap
        if hw % tn == 0:
            return tn, hw
        tn -= 128
    # Awkward HW (> cap, no 128-multiple divisor): pad the lane axis instead of
    # silently using one huge tile that could blow v7x's 64 MiB VMEM.
    # TODO(synk): this rare path costs one extra HBM pass to pad the lane axis.
    tn = (cap // 128) * 128
    return tn, ((hw + tn - 1) // tn) * tn


# --------------------------------------------------------------------------- #
# UniPC sampler (driver)
# --------------------------------------------------------------------------- #
class UniPCSamplerPallas:
    """Uni-PC multistep sampler (orders 1/2, 'bh2' variant) on TPU via Pallas."""

    def __init__(self, num_steps=6, order=2, cond_scale=1.0, x0_pred=True):
        # TODO(synk): order > 2 would need a longer model history and an
        # in-table R-solve; the reference's rhos_p=[0.5] shortcut is order-2.
        assert order in (1, 2)
        assert num_steps >= order
        self.num_steps = num_steps
        self.order = order
        self.cond_scale = cond_scale      # unused by the synthetic affine net
        self.x0_pred = x0_pred
        self._sample = jax.jit(self._sample_impl)

    # ---- scalar schedule helpers ------------------------------------------ #
    @staticmethod
    def sigma_to_lambd(sigma):
        logsnr_min, logsnr_max = -15.0, 15.0
        t_min = math.atan(math.exp(-0.5 * logsnr_max))
        t_max = math.atan(math.exp(-0.5 * logsnr_min))
        return -2.0 * jnp.log(jnp.tan(t_min + sigma * (t_max - t_min)))

    @staticmethod
    def lambda_to_sigma(lambd):
        return jnp.sqrt(jax.nn.sigmoid(-lambd))

    # ---- per-step coefficient table (vectorized, host/XLA side) ----------- #
    def _schedule(self, sigmas):
        ns = self.num_steps
        sig = self.lambda_to_sigma
        lambds = jnp.linspace(self.sigma_to_lambd(sigmas[0]),
                              self.sigma_to_lambd(sigmas[-1]), ns + 1)
        ts = jnp.arange(ns + 1)

        lc = lambds                                                   # lambda_cur
        lp0 = jnp.concatenate([lambds[:1], lambds[:-1]])              # lambda_prev_0
        lp1 = jnp.concatenate([lambds[:1], lambds[:1], lambds[:-2]])  # lambda_prev_1

        upd = ts >= 1                     # rows that are sampler update steps
        corr = upd & (ts < ns)            # use_corrector (all but the last step)
        if self.order == 2:
            o2 = (ts >= 2) & (ts <= ns - 1)   # step_order == 2 rows
        else:
            o2 = jnp.zeros_like(upd)

        h = jnp.where(upd, lc - lp0, 1.0)          # safe dummy at t = 0
        hh = -h / 2.0 if self.x0_pred else h / 2.0
        h_phi_1 = jnp.expm1(hh)
        B_h = jnp.expm1(hh)                        # variant 'bh2'

        if self.x0_pred:
            a0 = sig(lc) / sig(lp0)
            a1 = -sig(-lc) * h_phi_1
            pred_scale = -sig(-lc) * B_h
            # NB: the reference x0-pred corrector uses plain -B_h (no alpha_t
            # factor) -- kept verbatim to preserve the module's semantics.
            corr_scale = -B_h
            cx, cv = sig(-lc), -sig(lc)
        else:
            a0 = sig(-lc) / sig(-lp0)
            a1 = -sig(lc) * h_phi_1
            pred_scale = -sig(lc) * B_h
            corr_scale = -sig(lc) * B_h
            cx, cv = sig(lc), sig(-lc)

        # order-2 extras (zero elsewhere, so the kernel needs no order branch)
        rk = jnp.where(o2, (lp1 - lp0) / h, -1.0)
        inv_rk = jnp.where(o2, 1.0 / rk, 0.0)
        p_d1 = jnp.where(o2, pred_scale * 0.5, 0.0)     # rhos_p = [0.5]

        # rhos_c: order 1 -> [0.5]; order 2 -> closed-form solve of
        #   [[1, 1], [rk, 1]] @ rhos = [b1, b2]
        b1 = (h_phi_1 / hh - 1.0) / B_h
        b2 = ((h_phi_1 / hh - 1.0) / hh - 0.5) * 2.0 / B_h
        rc0_o2 = (b1 - b2) / (1.0 - rk)
        rc_first = jnp.where(o2, rc0_o2, 0.0)
        rc_last = jnp.where(o2, b1 - rc0_o2, 0.5)

        c_m0 = jnp.where(corr, a1 - corr_scale * rc_last, a1)
        c_d1 = jnp.where(corr, corr_scale * rc_first, p_d1)
        c_mt = jnp.where(corr, corr_scale * rc_last, 0.0)

        # row 0 (init step): only sigma0 is consumed; keep the rest benign.
        a0 = jnp.where(upd, a0, 1.0)
        a1 = jnp.where(upd, a1, 0.0)
        sigma0 = jnp.full((ns + 1,), sigmas[0])

        coefs = jnp.stack(
            [inv_rk, a0, a1, p_d1, c_m0, c_d1, c_mt, sigma0], axis=1
        ).astype(jnp.float32)
        return coefs, cx.astype(jnp.float32), cv.astype(jnp.float32)

    # ---- fused sampler ----------------------------------------------------- #
    def _sample_impl(self, noise, net_w, net_b, sigmas):
        B, C, H, W = noise.shape
        HW = H * W
        ns = self.num_steps

        # NCHW -> (B, C, H*W): free reshape (no transpose / extra HBM pass);
        # the sigma0 pre-scale happens inside the kernel at t == 0.
        noise3 = noise.reshape(B, C, HW).astype(jnp.float32)

        coefs, cx, cv = self._schedule(sigmas)

        # Fold the UniPC combine model = cx*x + cv*(W@x + b) into per-step
        # effective weights: W'_t = cv_t*W + cx_t*I, b'_t = cv_t*b.
        w32 = net_w.astype(jnp.float32)
        b32 = net_b.astype(jnp.float32).reshape(1, C, 1)
        eye = jnp.eye(C, dtype=jnp.float32)
        wt = cv[:, None, None] * w32[None] + cx[:, None, None] * eye[None]
        bt = cv[:, None, None] * b32

        tn, hw_pad = _plan_lanes(HW, C)
        if hw_pad != HW:
            noise3 = jnp.pad(noise3, ((0, 0), (0, 0), (0, hw_pad - HW)))
        n_tiles = hw_pad // tn

        x_out = pl.pallas_call(
            _unipc_sampler_kernel,
            out_shape=jax.ShapeDtypeStruct((B, C, hw_pad), jnp.float32),
            grid=(B, n_tiles, ns + 1),
            in_specs=[
                # per-step scalar coefficient table, lives in SMEM
                pl.BlockSpec(memory_space=pltpu.MemorySpace.SMEM),
                # noise tile: constant block index along the step axis -> one DMA
                pl.BlockSpec((pl.Squeezed(), C, tn), lambda b, n, t: (b, 0, n)),
                # per-step folded weight / bias (tiny, indexed by the step axis)
                pl.BlockSpec((pl.Squeezed(), C, C), lambda b, n, t: (t, 0, 0)),
                pl.BlockSpec((pl.Squeezed(), C, 1), lambda b, n, t: (t, 0, 0)),
            ],
            out_specs=pl.BlockSpec((pl.Squeezed(), C, tn),
                                   lambda b, n, t: (b, 0, n)),
            scratch_shapes=[pltpu.VMEM((2, C, tn), jnp.float32)],  # model history
            compiler_params=pltpu.CompilerParams(
                # batch / lane-tile axes are independent; the step axis carries
                # the sampler state and must stay sequential.
                # TODO(synk): on v7x, verify megacore sharding of the tile axes
                # (pltpu.CORE_PARALLEL) actually splits work across both TCs.
                dimension_semantics=("parallel", "parallel", "arbitrary"),
                vmem_limit_bytes=32 << 20,
            ),
        )(coefs, noise3, wt, bt)

        if hw_pad != HW:
            x_out = x_out[:, :, :HW]
        # (B, C, H*W) -> NCHW (clamp already fused into the last step)
        return x_out.reshape(B, C, H, W)

    def __call__(self, noise, net_w, net_b, sigmas):
        return self._sample(noise, net_w, net_b, sigmas)


# --------------------------------------------------------------------------- #
# Plain-jnp port of the PyTorch module (numerical cross-check only)
# --------------------------------------------------------------------------- #
def _reference_unipc(noise, net_w, net_b, sigmas, num_steps, order, x0_pred=True):
    lts = UniPCSamplerPallas.lambda_to_sigma
    stl = UniPCSamplerPallas.sigma_to_lambd
    hp = jax.lax.Precision.HIGHEST

    def denoise(x):                       # synthetic 1x1-conv net on NCHW
        return (jnp.einsum('oc,bchw->bohw', net_w, x, precision=hp)
                + net_b[None, :, None, None])

    def model_fn(x, lambd):
        v = denoise(x)
        if x0_pred:
            return lts(-lambd) * x - lts(lambd) * v
        return lts(lambd) * x + lts(-lambd) * v

    def update(x, mpl, lpl, lc, order, use_corrector):
        lp0, m0 = lpl[-1], mpl[-1]
        h = lc - lp0
        D1 = None
        rk = None
        if order == 2:
            rk = (lpl[-2] - lp0) / h
            D1 = (mpl[-2] - m0) / rk
        hh = -h / 2 if x0_pred else h / 2
        h_phi_1 = jnp.expm1(hh)
        B_h = jnp.expm1(hh)               # 'bh2'
        if order == 1:
            rhos_c = [0.5]
        else:
            b1 = (h_phi_1 / hh - 1.0) / B_h
            b2 = ((h_phi_1 / hh - 1.0) / hh - 0.5) * 2.0 / B_h
            rc0 = (b1 - b2) / (1.0 - rk)
            rhos_c = [rc0, b1 - rc0]
        model_t = None
        if x0_pred:
            x_t_ = lts(lc) / lts(lp0) * x - lts(-lc) * h_phi_1 * m0
            pred_res = 0.5 * D1 if order == 2 else 0.0
            x_t = x_t_ - lts(-lc) * B_h * pred_res
            if use_corrector:
                model_t = model_fn(x_t, lc)
                corr_res = rhos_c[0] * D1 if order == 2 else 0.0
                x_t = x_t_ - B_h * (corr_res + rhos_c[-1] * (model_t - m0))
        else:
            x_t_ = lts(-lc) / lts(-lp0) * x - lts(lc) * h_phi_1 * m0
            pred_res = 0.5 * D1 if order == 2 else 0.0
            x_t = x_t_ - lts(lc) * B_h * pred_res
            if use_corrector:
                model_t = model_fn(x_t, lc)
                corr_res = rhos_c[0] * D1 if order == 2 else 0.0
                x_t = x_t_ - lts(lc) * B_h * (corr_res + rhos_c[-1] * (model_t - m0))
        return x_t, model_t

    x = sigmas[0] * noise
    lambds = jnp.linspace(stl(sigmas[0]), stl(sigmas[-1]), num_steps + 1)
    mpl = [model_fn(x, lambds[0])]
    lpl = [lambds[0]]
    for step in range(1, order):
        x, model_x = update(x, mpl, lpl, lambds[step], step, True)
        lpl.append(lambds[step])
        mpl.append(model_x)
    for step in range(order, num_steps + 1):
        step_order = min(order, num_steps + 1 - step)
        use_corrector = step != num_steps
        x, model_x = update(x, mpl, lpl, lambds[step], step_order, use_corrector)
        for i in range(order - 1):
            lpl[i] = lpl[i + 1]
            mpl[i] = mpl[i + 1]
        lpl[-1] = lambds[step]
        if step < num_steps:
            mpl[-1] = model_x
    return jnp.clip(x, -1.0, 1.0)


# --------------------------------------------------------------------------- #
if __name__ == "__main__":
    key = jax.random.PRNGKey(0)
    k_noise, k_w, k_b = jax.random.split(key, 3)

    B, C, H, W = 2, 8, 16, 16             # B=2, C=8, 16x16 spatial
    num_steps, order = 6, 2

    noise = jax.random.normal(k_noise, (B, C, H, W), jnp.float32)
    net_w = 0.3 * jax.random.normal(k_w, (C, C), jnp.float32)    # synthetic 1x1-conv
    net_b = 0.05 * jax.random.normal(k_b, (C,), jnp.float32)     # synthetic bias
    sigmas = jnp.linspace(0.995, 0.005, num_steps + 1, dtype=jnp.float32)

    sampler = UniPCSamplerPallas(num_steps=num_steps, order=order,
                                 cond_scale=1.0, x0_pred=True)
    out = jax.block_until_ready(sampler(noise, net_w, net_b, sigmas))

    assert out.shape == (B, C, H, W)
    assert bool(jnp.all(jnp.isfinite(out)))

    # numerical cross-check of the fused kernel against the plain-jnp port
    ref = jax.block_until_ready(
        _reference_unipc(noise, net_w, net_b, sigmas, num_steps, order, x0_pred=True))
    max_err = float(jnp.max(jnp.abs(out - ref)))
    assert bool(jnp.allclose(out, ref, atol=5e-3, rtol=5e-3)), max_err

    print("KERNEL_OK")
</pallas_src>

<mosaic_0001>
module attributes {stable_mosaic.version = 11 : i64} {
  func.func @_unipc_sampler_kernel(%arg0: i32, %arg1: i32, %arg2: i32, %arg3: memref<7x8xf32, #tpu.memory_space<smem>>, %arg4: memref<1x8x256xf32, #tpu.memory_space<vmem>>, %arg5: memref<1x8x8xf32, #tpu.memory_space<vmem>>, %arg6: memref<1x8x1xf32, #tpu.memory_space<vmem>>, %arg7: memref<1x8x256xf32, #tpu.memory_space<vmem>>, %arg8: memref<2x8x256xf32, #tpu.memory_space<vmem>>) attributes {dimension_semantics = [#tpu.dimension_semantics<parallel>, #tpu.dimension_semantics<parallel>, #tpu.dimension_semantics<arbitrary>], iteration_bounds = array<i64: 2, 1, 7>, scalar_prefetch = 0 : i64, scratch_operands = 1 : i64, tpu.core_type = #tpu.core_type<tc>, window_params = [{transform_indices = @transform_0, window_bounds = array<i64: 7, 8>}, {transform_indices = @transform_1, window_bounds = array<i64: 1, 8, 256>}, {transform_indices = @transform_2, window_bounds = array<i64: 1, 8, 8>}, {transform_indices = @transform_3, window_bounds = array<i64: 1, 8, 1>}, {transform_indices = @transform_4, window_bounds = array<i64: 1, 8, 256>}]} {
    %c0_i32 = arith.constant 0 : i32
    %0 = arith.cmpi eq, %arg2, %c0_i32 : i32
    %1 = arith.extui %0 : i1 to i32
    %c0_i32_0 = arith.constant 0 : i32
    %2 = arith.cmpi ne, %1, %c0_i32_0 : i32
    scf.if %2 {
      %c0 = arith.constant 0 : index
      %c7 = arith.constant 7 : index
      %6 = memref.load %arg3[%c0, %c7] : memref<7x8xf32, #tpu.memory_space<smem>>
      %c0_3 = arith.constant 0 : index
      %c0_4 = arith.constant 0 : index
      %c0_5 = arith.constant 0 : index
      %7 = vector.load %arg4[%c0_3, %c0_4, %c0_5] : memref<1x8x256xf32, #tpu.memory_space<vmem>>, vector<1x8x256xf32>
      %8 = vector.shape_cast %7 : vector<1x8x256xf32> to vector<8x256xf32>
      %9 = vector.broadcast %6 : f32 to vector<8x256xf32>
      %10 = arith.mulf %9, %8 : vector<8x256xf32>
      %c0_6 = arith.constant 0 : index
      %c0_7 = arith.constant 0 : index
      %c0_8 = arith.constant 0 : index
      %11 = vector.load %arg7[%c0_6, %c0_7, %c0_8] : memref<1x8x256xf32, #tpu.memory_space<vmem>>, vector<1x8x256xf32>
      %12 = vector.shape_cast %11 : vector<1x8x256xf32> to vector<8x256xf32>
      %13 = vector.shape_cast %10 : vector<8x256xf32> to vector<1x8x256xf32>
      tpu.vector_store %arg7[%c0_6, %c0_7, %c0_8], %13 {strides = array<i32>} : memref<1x8x256xf32, #tpu.memory_space<vmem>>, vector<1x8x256xf32>,
      %c0_9 = arith.constant 0 : index
      %c0_10 = arith.constant 0 : index
      %c0_11 = arith.constant 0 : index
      %14 = vector.load %arg5[%c0_9, %c0_10, %c0_11] : memref<1x8x8xf32, #tpu.memory_space<vmem>>, vector<1x8x8xf32>
      %15 = vector.shape_cast %14 : vector<1x8x8xf32> to vector<8x8xf32>
      %cst = arith.constant dense<0.000000e+00> : vector<8x256xf32>
      %16 = tpu.matmul %15, %10, %cst {dimension_numbers = #tpu.dot_dimension_numbers<[1], [0], [0], [1], [0, 0, 1, 1], [], []>, precision = #tpu.contract_precision<fp32>} : vector<8x8xf32>, vector<8x256xf32>, vector<8x256xf32> -> vector<8x256xf32>
      %c0_12 = arith.constant 0 : index
      %c0_13 = arith.constant 0 : index
      %c0_14 = arith.constant 0 : index
      %17 = vector.load %arg6[%c0_12, %c0_13, %c0_14] : memref<1x8x1xf32, #tpu.memory_space<vmem>>, vector<1x8x1xf32>
      %18 = vector.shape_cast %17 : vector<1x8x1xf32> to vector<8x1xf32>
      %19 = vector.broadcast %18 : vector<8x1xf32> to vector<8x256xf32>
      %20 = arith.addf %16, %19 : vector<8x256xf32>
      %c0_15 = arith.constant 0 : index
      %c0_16 = arith.constant 0 : index
      %c0_17 = arith.constant 0 : index
      %21 = vector.load %arg8[%c0_15, %c0_16, %c0_17] : memref<2x8x256xf32, #tpu.memory_space<vmem>>, vector<1x8x256xf32>
      %22 = vector.shape_cast %21 : vector<1x8x256xf32> to vector<8x256xf32>
      %23 = vector.shape_cast %20 : vector<8x256xf32> to vector<1x8x256xf32>
      tpu.vector_store %arg8[%c0_15, %c0_16, %c0_17], %23 {strides = array<i32>} : memref<2x8x256xf32, #tpu.memory_space<vmem>>, vector<1x8x256xf32>,
      %c1 = arith.constant 1 : index
      %c0_18 = arith.constant 0 : index
      %c0_19 = arith.constant 0 : index
      %24 = vector.load %arg8[%c1, %c0_18, %c0_19] : memref<2x8x256xf32, #tpu.memory_space<vmem>>, vector<1x8x256xf32>
      %25 = vector.shape_cast %24 : vector<1x8x256xf32> to vector<8x256xf32>
      %26 = vector.shape_cast %20 : vector<8x256xf32> to vector<1x8x256xf32>
      tpu.vector_store %arg8[%c1, %c0_18, %c0_19], %26 {strides = array<i32>} : memref<2x8x256xf32, #tpu.memory_space<vmem>>, vector<1x8x256xf32>,
    } else {
    }
    %c0_i32_1 = arith.constant 0 : i32
    %3 = arith.cmpi sgt, %arg2, %c0_i32_1 : i32
    %4 = arith.extui %3 : i1 to i32
    %c0_i32_2 = arith.constant 0 : i32
    %5 = arith.cmpi ne, %4, %c0_i32_2 : i32
    scf.if %5 {
      %6 = arith.index_cast %arg2 : i32 to index
      %c0 = arith.constant 0 : index
      %7 = memref.load %arg3[%6, %c0] : memref<7x8xf32, #tpu.memory_space<smem>>
      %8 = arith.index_cast %arg2 : i32 to index
      %c1 = arith.constant 1 : index
      %9 = memref.load %arg3[%8, %c1] : memref<7x8xf32, #tpu.memory_space<smem>>
      %10 = arith.index_cast %arg2 : i32 to index
      %c2 = arith.constant 2 : index
      %11 = memref.load %arg3[%10, %c2] : memref<7x8xf32, #tpu.memory_space<smem>>
      %12 = arith.index_cast %arg2 : i32 to index
      %c3 = arith.constant 3 : index
      %13 = memref.load %arg3[%12, %c3] : memref<7x8xf32, #tpu.memory_space<smem>>
      %c1_i32 = arith.constant 1 : i32
      %14 = arith.subi %arg2, %c1_i32 : i32
      %c1_i32_3 = arith.constant 1 : i32
      %15 = arith.andi %14, %c1_i32_3 : i32
      %c1_i32_4 = arith.constant 1 : i32
      %16 = arith.andi %arg2, %c1_i32_4 : i32
      %c0_5 = arith.constant 0 : index
      %c0_6 = arith.constant 0 : index
      %c0_7 = arith.constant 0 : index
      %17 = vector.load %arg7[%c0_5, %c0_6, %c0_7] : memref<1x8x256xf32, #tpu.memory_space<vmem>>, vector<1x8x256xf32>
      %18 = vector.shape_cast %17 : vector<1x8x256xf32> to vector<8x256xf32>
      %19 = arith.index_cast %15 : i32 to index
      %c0_8 = arith.constant 0 : index
      %c0_9 = arith.constant 0 : index
      %20 = vector.load %arg8[%19, %c0_8, %c0_9] : memref<2x8x256xf32, #tpu.memory_space<vmem>>, vector<1x8x256xf32>
      %21 = vector.shape_cast %20 : vector<1x8x256xf32> to vector<8x256xf32>
      %22 = arith.index_cast %16 : i32 to index
      %c0_10 = arith.constant 0 : index
      %c0_11 = arith.constant 0 : index
      %23 = vector.load %arg8[%22, %c0_10, %c0_11] : memref<2x8x256xf32, #tpu.memory_space<vmem>>, vector<1x8x256xf32>
      %24 = vector.shape_cast %23 : vector<1x8x256xf32> to vector<8x256xf32>
      %25 = arith.subf %24, %21 : vector<8x256xf32>
      %26 = vector.broadcast %7 : f32 to vector<8x256xf32>
      %27 = arith.mulf %26, %25 : vector<8x256xf32>
      %28 = vector.broadcast %9 : f32 to vector<8x256xf32>
      %29 = arith.mulf %28, %18 : vector<8x256xf32>
      %30 = vector.broadcast %11 : f32 to vector<8x256xf32>
      %31 = arith.mulf %30, %21 : vector<8x256xf32>
      %32 = arith.addf %29, %31 : vector<8x256xf32>
      %33 = vector.broadcast %13 : f32 to vector<8x256xf32>
      %34 = arith.mulf %33, %27 : vector<8x256xf32>
      %35 = arith.addf %32, %34 : vector<8x256xf32>
      %c6_i32 = arith.constant 6 : i32
      %36 = arith.cmpi slt, %arg2, %c6_i32 : i32
      %37 = arith.extui %36 : i1 to i32
      %c0_i32_12 = arith.constant 0 : i32
      %38 = arith.cmpi ne, %37, %c0_i32_12 : i32
      scf.if %38 {
        %42 = arith.index_cast %arg2 : i32 to index
        %c4 = arith.constant 4 : index
        %43 = memref.load %arg3[%42, %c4] : memref<7x8xf32, #tpu.memory_space<smem>>
        %44 = arith.index_cast %arg2 : i32 to index
        %c5 = arith.constant 5 : index
        %45 = memref.load %arg3[%44, %c5] : memref<7x8xf32, #tpu.memory_space<smem>>
        %46 = arith.index_cast %arg2 : i32 to index
        %c6 = arith.constant 6 : index
        %47 = memref.load %arg3[%46, %c6] : memref<7x8xf32, #tpu.memory_space<smem>>
        %c0_15 = arith.constant 0 : index
        %c0_16 = arith.constant 0 : index
        %c0_17 = arith.constant 0 : index
        %48 = vector.load %arg5[%c0_15, %c0_16, %c0_17] : memref<1x8x8xf32, #tpu.memory_space<vmem>>, vector<1x8x8xf32>
        %49 = vector.shape_cast %48 : vector<1x8x8xf32> to vector<8x8xf32>
        %cst = arith.constant dense<0.000000e+00> : vector<8x256xf32>
        %50 = tpu.matmul %49, %35, %cst {dimension_numbers = #tpu.dot_dimension_numbers<[1], [0], [0], [1], [0, 0, 1, 1], [], []>, precision = #tpu.contract_precision<fp32>} : vector<8x8xf32>, vector<8x256xf32>, vector<8x256xf32> -> vector<8x256xf32>
        %c0_18 = arith.constant 0 : index
        %c0_19 = arith.constant 0 : index
        %c0_20 = arith.constant 0 : index
        %51 = vector.load %arg6[%c0_18, %c0_19, %c0_20] : memref<1x8x1xf32, #tpu.memory_space<vmem>>, vector<1x8x1xf32>
        %52 = vector.shape_cast %51 : vector<1x8x1xf32> to vector<8x1xf32>
        %53 = vector.broadcast %52 : vector<8x1xf32> to vector<8x256xf32>
        %54 = arith.addf %50, %53 : vector<8x256xf32>
        %55 = vector.broadcast %43 : f32 to vector<8x256xf32>
        %56 = arith.mulf %55, %21 : vector<8x256xf32>
        %57 = arith.addf %29, %56 : vector<8x256xf32>
        %58 = vector.broadcast %45 : f32 to vector<8x256xf32>
        %59 = arith.mulf %58, %27 : vector<8x256xf32>
        %60 = arith.addf %57, %59 : vector<8x256xf32>
        %61 = vector.broadcast %47 : f32 to vector<8x256xf32>
        %62 = arith.mulf %61, %54 : vector<8x256xf32>
        %63 = arith.addf %60, %62 : vector<8x256xf32>
        %c0_21 = arith.constant 0 : index
        %c0_22 = arith.constant 0 : index
        %c0_23 = arith.constant 0 : index
        %64 = vector.load %arg7[%c0_21, %c0_22, %c0_23] : memref<1x8x256xf32, #tpu.memory_space<vmem>>, vector<1x8x256xf32>
        %65 = vector.shape_cast %64 : vector<1x8x256xf32> to vector<8x256xf32>
        %66 = vector.shape_cast %63 : vector<8x256xf32> to vector<1x8x256xf32>
        tpu.vector_store %arg7[%c0_21, %c0_22, %c0_23], %66 {strides = array<i32>} : memref<1x8x256xf32, #tpu.memory_space<vmem>>, vector<1x8x256xf32>,
        %67 = arith.index_cast %16 : i32 to index
        %c0_24 = arith.constant 0 : index
        %c0_25 = arith.constant 0 : index
        %68 = vector.load %arg8[%67, %c0_24, %c0_25] : memref<2x8x256xf32, #tpu.memory_space<vmem>>, vector<1x8x256xf32>
        %69 = vector.shape_cast %68 : vector<1x8x256xf32> to vector<8x256xf32>
        %70 = vector.shape_cast %54 : vector<8x256xf32> to vector<1x8x256xf32>
        tpu.vector_store %arg8[%67, %c0_24, %c0_25], %70 {strides = array<i32>} : memref<2x8x256xf32, #tpu.memory_space<vmem>>, vector<1x8x256xf32>,
      } else {
      }
      %c6_i32_13 = arith.constant 6 : i32
      %39 = arith.cmpi eq, %arg2, %c6_i32_13 : i32
      %40 = arith.extui %39 : i1 to i32
      %c0_i32_14 = arith.constant 0 : i32
      %41 = arith.cmpi ne, %40, %c0_i32_14 : i32
      scf.if %41 {
        %cst = arith.constant -1.000000e+00 : f32
        %cst_15 = arith.constant 1.000000e+00 : f32
        %42 = vector.broadcast %cst : f32 to vector<8x256xf32>
        %43 = arith.maximumf %42, %35 : vector<8x256xf32>
        %44 = vector.broadcast %cst_15 : f32 to vector<8x256xf32>
        %45 = arith.minimumf %44, %43 : vector<8x256xf32>
        %c0_16 = arith.constant 0 : index
        %c0_17 = arith.constant 0 : index
        %c0_18 = arith.constant 0 : index
        %46 = vector.load %arg7[%c0_16, %c0_17, %c0_18] : memref<1x8x256xf32, #tpu.memory_space<vmem>>, vector<1x8x256xf32>
        %47 = vector.shape_cast %46 : vector<1x8x256xf32> to vector<8x256xf32>
        %48 = vector.shape_cast %45 : vector<8x256xf32> to vector<1x8x256xf32>
        tpu.vector_store %arg7[%c0_16, %c0_17, %c0_18], %48 {strides = array<i32>} : memref<1x8x256xf32, #tpu.memory_space<vmem>>, vector<1x8x256xf32>,
      } else {
      }
    } else {
    }
    return
  }
  func.func @transform_0(%arg0: i32, %arg1: i32, %arg2: i32) -> (i32, i32) {
    %c0_i32 = arith.constant 0 : i32
    %c0_i32_0 = arith.constant 0 : i32
    %c0_i32_1 = arith.constant 0 : i32
    return %c0_i32, %c0_i32_0 : i32, i32
  }
  func.func @transform_1(%arg0: i32, %arg1: i32, %arg2: i32) -> (i32, i32, i32) {
    %c0_i32 = arith.constant 0 : i32
    %c0_i32_0 = arith.constant 0 : i32
    return %arg0, %c0_i32, %arg1 : i32, i32, i32
  }
  func.func @transform_2(%arg0: i32, %arg1: i32, %arg2: i32) -> (i32, i32, i32) {
    %c0_i32 = arith.constant 0 : i32
    %c0_i32_0 = arith.constant 0 : i32
    %c0_i32_1 = arith.constant 0 : i32
    return %arg2, %c0_i32, %c0_i32_0 : i32, i32, i32
  }
  func.func @transform_3(%arg0: i32, %arg1: i32, %arg2: i32) -> (i32, i32, i32) {
    %c0_i32 = arith.constant 0 : i32
    %c0_i32_0 = arith.constant 0 : i32
    %c0_i32_1 = arith.constant 0 : i32
    return %arg2, %c0_i32, %c0_i32_0 : i32, i32, i32
  }
  func.func @transform_4(%arg0: i32, %arg1: i32, %arg2: i32) -> (i32, i32, i32) {
    %c0_i32 = arith.constant 0 : i32
    %c0_i32_0 = arith.constant 0 : i32
    return %arg0, %c0_i32, %arg1 : i32, i32, i32
  }
}

</mosaic_0001>

<llo_original>
// kernel: _sample_impl.1
$region0: #{_sample_impl.1}
  #allocation0 [shape = 'u32[]', space=smem, size = 0x4, offset = 0x4, fixed_abs, tag = 'smem constant byte address 0x4 - core index']
  #allocation1 [shape = 'u32[144,128]{1,0:T(1,128)}', space=vmem, size = 0x12000, scoped, tag = 'internal scratch']
  #allocation2 [shape = 'f32[2,8,256]{2,1,0:T(8,128)}', space=vmem, size = 0x4000, scoped, tag = 'scratch operand']
  %s0 = inlined_call_operand.vmem [shape: f32[7,8], index: 0, kind: input, shape index: {}]
  %s1 = inlined_call_operand.vmem [shape: f32[2,8,256], index: 1, kind: input, shape index: {}]
  %s2 = inlined_call_operand.vmem [shape: f32[7,8,8], index: 2, kind: input, shape index: {}]
  %s3 = inlined_call_operand.vmem [shape: f32[7,8,1], index: 3, kind: input, shape index: {}]
  %s4 = inlined_call_operand.vmem [shape: f32[2,8,256], index: 4, kind: output, shape index: {}]
  %s5 = sld [smem:[#allocation0]]
  $region69: #{_sample_impl.1} parent=0
    _
  %s7 = ssub.s32 1, %s5
  %s8 = scalar_select 0, %s7, %s5
  $region1: #{_sample_impl.1} parent=0
    #allocation3 [shape = 'u8[4096]{0}', space=smem, size = 0x1000, scoped, tag = 'input window, operand 0, single buffered']
    #allocation4 [shape = 's32[2]{0}', space=sflag, size = 0x8, scoped, tag = 'scoped memory for _sample_impl.1']
    %9 = vsyncpa [#allocation4], 0
    loop: start=0, step=1, limit=16
    $region2: #{_sample_impl.1} parent=1 // loop_pre_header
      _
    $region3: #{_sample_impl.1} parent=1 // loop_header
      %s11 = sphi 0, %s15
      %p12 = scmp.ge.s32.totalorder %s11, 16
      %s18 = sphi 0, %s37
      %s19 = sphi 0, %s33
      %s20 = sphi 0, %s29
      %s21 = sphi 0, %s18
      %s22 = sphi 0, %s19
      %s23 = sphi 0, %s20
      %s24 = sphi 0, %s21
      %s25 = sphi 0, %s22
      %s26 = sphi 0, %s23
      %s38 = sphi 0, %s38
      %s40 = sphi 0, %s38
      %s41 = sphi 0, %s40
      %s55 = sphi 0, %s41
      %s63 = sphi 0, %s65
      %s66 = sphi 0, %s63
      %s67 = sphi 0, %s66
      %s83 = sphi 0, %s67
      %s89 = sphi 0, %s91
      %s92 = sphi 0, %s89
      %s93 = sphi 0, %s92
      %s109 = sphi 0, %s93
      %s115 = sphi 0, %s117
      %s118 = sphi 0, %s115
      %s119 = sphi 0, %s118
      %s135 = sphi 0, %s119
      %s143 = sphi 0, %s145
      %s146 = sphi 0, %s143
      %s147 = sphi 0, %s146
      %s163 = sphi 0, %s147
    $region4: #{_sample_impl.1} parent=1 // loop_header_branch
      %14 = sbr.rel (%p12) target = $region8
    $region5: #{_sample_impl.1} parent=1 // loop_body
      %s16 = ssub.s32 %s11, 1
      %s17 = ssub.s32 %s11, 2
      %s27 = sadd.s32 1, %s20
      %p28 = scmp.ge.s32.totalorder %s27, 7
      %s29 = scalar_select %p28, 0, %s27
      %s30 = sadd.s32 1, %s19
      %s31 = scalar_select %p28, %s30, %s19
      %p32 = scmp.ge.s32.totalorder %s31, 1
      %s33 = scalar_select %p32, 0, %s31
      %s34 = sadd.s32 1, %s18
      %s35 = scalar_select %p32, %s34, %s18
      %p36 = scmp.ge.s32.totalorder %s35, 2
      %s37 = scalar_select %p36, 0, %s35
      %s39 = sadd.s32 %s38, 1
      %p42 = scmp.eq.s32.totalorder %s11, 13
      %p43 = scmp.ne.s32.totalorder %s38, %s40
      %p44 = scmp.eq.s32.totalorder %s11, 0
      %p45 = por %p43, %p44
      %p46 = scmp.ne.s32.totalorder %s38, %s40
      %p47 = scmp.eq.s32.totalorder %s16, 13
      %p48 = por %p46, %p47
      %p49 = scmp.ne.s32.totalorder %s40, %s41
      %p50 = scmp.eq.s32.totalorder %s16, 0
      %p51 = por %p49, %p50
      %p52 = scmp.ne.s32.totalorder %s40, %s41
      %p53 = scmp.eq.s32.totalorder %s17, 13
      %p54 = por %p52, %p53
      %p56 = scmp.ne.s32.totalorder %s41, %s55
      %p57 = scmp.eq.s32.totalorder %s17, 0
      %p58 = por %p56, %p57
      %s59 = ssub.s32 %s18, %s37
      %s60 = ssub.s32 %s19, %s33
      %s61 = sor.u32 %s59, %s60
      %p62 = scmp.eq.s32.totalorder %s61, 0
      %s64 = sadd.s32 %s63, 1
      %s65 = scalar_select %p62, %s63, %s64
      %p68 = pneg %p62
      %p69 = scmp.eq.s32.totalorder %s11, 13
      %p70 = por %p68, %p69
      %p71 = scmp.ne.s32.totalorder %s63, %s66
      %p72 = scmp.eq.s32.totalorder %s11, 0
      %p73 = por %p71, %p72
      %p74 = scmp.ne.s32.totalorder %s63, %s66
      %p75 = scmp.eq.s32.totalorder %s16, 13
      %p76 = por %p74, %p75
      %p77 = scmp.ne.s32.totalorder %s66, %s67
      %p78 = scmp.eq.s32.totalorder %s16, 0
      %p79 = por %p77, %p78
      %p80 = scmp.ne.s32.totalorder %s66, %s67
      %p81 = scmp.eq.s32.totalorder %s17, 13
      %p82 = por %p80, %p81
      %p84 = scmp.ne.s32.totalorder %s67, %s83
      %p85 = scmp.eq.s32.totalorder %s17, 0
      %p86 = por %p84, %p85
      %s87 = ssub.s32 %s20, %s29
      %p88 = scmp.eq.s32.totalorder %s87, 0
      %s90 = sadd.s32 %s89, 1
      %s91 = scalar_select %p88, %s89, %s90
      %p94 = pneg %p88
      %p95 = scmp.eq.s32.totalorder %s11, 13
      %p96 = por %p94, %p95
      %p97 = scmp.ne.s32.totalorder %s89, %s92
      %p98 = scmp.eq.s32.totalorder %s11, 0
      %p99 = por %p97, %p98
      %p100 = scmp.ne.s32.totalorder %s89, %s92
      %p101 = scmp.eq.s32.totalorder %s16, 13
      %p102 = por %p100, %p101
      %p103 = scmp.ne.s32.totalorder %s92, %s93
      %p104 = scmp.eq.s32.totalorder %s16, 0
      %p105 = por %p103, %p104
      %p106 = scmp.ne.s32.totalorder %s92, %s93
      %p107 = scmp.eq.s32.totalorder %s17, 13
      %p108 = por %p106, %p107
      %p110 = scmp.ne.s32.totalorder %s93, %s109
      %p111 = scmp.eq.s32.totalorder %s17, 0
      %p112 = por %p110, %p111
      %s113 = ssub.s32 %s20, %s29
      %p114 = scmp.eq.s32.totalorder %s113, 0
      %s116 = sadd.s32 %s115, 1
      %s117 = scalar_select %p114, %s115, %s116
      %p120 = pneg %p114
      %p121 = scmp.eq.s32.totalorder %s11, 13
      %p122 = por %p120, %p121
      %p123 = scmp.ne.s32.totalorder %s115, %s118
      %p124 = scmp.eq.s32.totalorder %s11, 0
      %p125 = por %p123, %p124
      %p126 = scmp.ne.s32.totalorder %s115, %s118
      %p127 = scmp.eq.s32.totalorder %s16, 13
      %p128 = por %p126, %p127
      %p129 = scmp.ne.s32.totalorder %s118, %s119
      %p130 = scmp.eq.s32.totalorder %s16, 0
      %p131 = por %p129, %p130
      %p132 = scmp.ne.s32.totalorder %s118, %s119
      %p133 = scmp.eq.s32.totalorder %s17, 13
      %p134 = por %p132, %p133
      %p136 = scmp.ne.s32.totalorder %s119, %s135
      %p137 = scmp.eq.s32.totalorder %s17, 0
      %p138 = por %p136, %p137
      %s139 = ssub.s32 %s18, %s37
      %s140 = ssub.s32 %s19, %s33
      %s141 = sor.u32 %s139, %s140
      %p142 = scmp.eq.s32.totalorder %s141, 0
      %s144 = sadd.s32 %s143, 1
      %s145 = scalar_select %p142, %s143, %s144
      %p148 = pneg %p142
      %p149 = scmp.eq.s32.totalorder %s11, 13
      %p150 = por %p148, %p149
      %p151 = scmp.ne.s32.totalorder %s143, %s146
      %p152 = scmp.eq.s32.totalorder %s11, 0
      %p153 = por %p151, %p152
      %p154 = scmp.ne.s32.totalorder %s143, %s146
      %p155 = scmp.eq.s32.totalorder %s16, 13
      %p156 = por %p154, %p155
      %p157 = scmp.ne.s32.totalorder %s146, %s147
      %p158 = scmp.eq.s32.totalorder %s16, 0
      %p159 = por %p157, %p158
      %p160 = scmp.ne.s32.totalorder %s146, %s147
      %p161 = scmp.eq.s32.totalorder %s17, 13
      %p162 = por %p160, %p161
      %p164 = scmp.ne.s32.totalorder %s147, %s163
      %p165 = scmp.eq.s32.totalorder %s17, 0
      %p166 = por %p164, %p165
      %p167 = scmp.le.s32.totalorder 1, %s11
      %p168 = scmp.lt.s32.totalorder %s11, 15
      %p169 = pnand %p167, %p168
      %p170 = pneg %p169
      // Predicated region
      $region9: #{_sample_impl.1} parent=5 // pred_check
        _
      $region10: #{_sample_impl.1} parent=5 // pred_check_branch
        %172 = sbr.rel (%p169) target = $region12
      $region11: #{_sample_impl.1} parent=5 // pred_region
        %s173 = ssub.s32 %s11, 1
        // Predicated region
        $region13: #{_sample_impl.1} parent=11 // pred_check
          %p174 = pneg %p51
        $region14: #{_sample_impl.1} parent=11 // pred_check_branch
          %176 = sbr.rel (%p174) target = $region16
        $region15: #{_sample_impl.1} parent=11 // pred_region
          %s178 = ssub.s32 128, 128
          %179 = vsyncadd [#allocation4], %s178
          %s181 = sshll.u32 %s0, 4
          %s182 = int_to_ptr.vmem [resolvable:$true] %s181
          %184 = dma.vmem_to_smem %s182, 128, [#allocation3], [#allocation4]
        $region16: #{_sample_impl.1} parent=11 // pred_fallthru
          _
      $region12: #{_sample_impl.1} parent=5 // pred_fallthru
        _
      %p185 = scmp.lt.s32.totalorder %s11, 14
      // Predicated region
      $region17: #{_sample_impl.1} parent=5 // pred_check
        %p186 = pneg %p185
      $region18: #{_sample_impl.1} parent=5 // pred_check_branch
        %188 = sbr.rel (%p186) target = $region20
      $region19: #{_sample_impl.1} parent=5 // pred_region
        // Predicated region
        $region21: #{_sample_impl.1} parent=19 // pred_check
          %p189 = pneg %p73
        $region22: #{_sample_impl.1} parent=19 // pred_check_branch
          %191 = sbr.rel (%p189) target = $region24
        $region23: #{_sample_impl.1} parent=19 // pred_region
          %s192 = smul.u32 2, %s19
          %p193 = scmp.lt.s32.totalorder %s18, 1
          %s194 = scalar_select %p193, %s18, 1
          %p195 = scmp.lt.s32.totalorder %s192, 1
          %s196 = scalar_select %p195, %s192, 1
          %s197 = smul.addr %s194, 2
          %s198 = sadd.s32 %s196, %s197
          %s199 = smul.addr %s198, 8
          %s200 = scalar_lea.vmem %s1, %s199
          %s201 = smul.u32 2, %s19
        $region24: #{_sample_impl.1} parent=19 // pred_fallthru
          _
        // Predicated region
        $region25: #{_sample_impl.1} parent=19 // pred_check
          %p202 = pneg %p99
        $region26: #{_sample_impl.1} parent=19 // pred_check_branch
          %204 = sbr.rel (%p202) target = $region28
        $region27: #{_sample_impl.1} parent=19 // pred_region
          %p205 = scmp.lt.s32.totalorder %s20, 6
          %s206 = scalar_select %p205, %s20, 6
          %s207 = smul.addr %s206, 8
          %s208 = scalar_lea.vmem %s2, %s207
        $region28: #{_sample_impl.1} parent=19 // pred_fallthru
          _
        // Predicated region
        $region29: #{_sample_impl.1} parent=19 // pred_check
          %p209 = pneg %p125
        $region30: #{_sample_impl.1} parent=19 // pred_check_branch
          %211 = sbr.rel (%p209) target = $region32
        $region31: #{_sample_impl.1} parent=19 // pred_region
          %p212 = scmp.lt.s32.totalorder %s20, 6
          %s213 = scalar_select %p212, %s20, 6
          %s214 = smul.addr %s213, 8
          %s215 = scalar_lea.vmem %s3, %s214
        $region32: #{_sample_impl.1} parent=19 // pred_fallthru
          _
      $region20: #{_sample_impl.1} parent=5 // pred_fallthru
        _
      %p216 = scmp.le.s32.totalorder 1, %s11
      %p217 = scmp.lt.s32.totalorder %s11, 15
      %p218 = pnand %p216, %p217
      %p219 = pneg %p218
      // Predicated region
      $region33: #{_sample_impl.1} parent=5 // pred_check
        _
      $region34: #{_sample_impl.1} parent=5 // pred_check_branch
        %221 = sbr.rel (%p218) target = $region36
      $region35: #{_sample_impl.1} parent=5 // pred_region
        %s222 = ssub.s32 %s11, 1
        // Predicated region
        $region37: #{_sample_impl.1} parent=35 // pred_check
          %p223 = pneg %p51
        $region38: #{_sample_impl.1} parent=35 // pred_check_branch
          %225 = sbr.rel (%p223) target = $region40
        $region39: #{_sample_impl.1} parent=35 // pred_region
          %226 = dma.done [#allocation4], 128
        $region40: #{_sample_impl.1} parent=35 // pred_fallthru
          _
        %227 = sfence
        %p228 = pneg %p51
        %p229 = pneg %p48
        %s230 = smul.u32 2, %s22
        %p231 = scmp.lt.s32.totalorder %s21, 1
        %s232 = scalar_select %p231, %s21, 1
        %p233 = scmp.lt.s32.totalorder %s230, 1
        %s234 = scalar_select %p233, %s230, 1
        %s235 = smul.addr %s232, 2
        %s236 = sadd.s32 %s234, %s235
        %s237 = smul.addr %s236, 8
        %s238 = scalar_lea.vmem %s1, %s237
        %p239 = pneg %p79
        %p240 = pneg %p76
        %p241 = scmp.lt.s32.totalorder %s23, 6
        %s242 = scalar_select %p241, %s23, 6
        %s243 = smul.addr %s242, 8
        %s244 = scalar_lea.vmem %s2, %s243
        %p245 = pneg %p105
        %p246 = pneg %p102
        %p247 = scmp.lt.s32.totalorder %s23, 6
        %s248 = scalar_select %p247, %s23, 6
        %s249 = smul.addr %s248, 8
        %s250 = scalar_lea.vmem %s3, %s249
        %p251 = pneg %p131
        %p252 = pneg %p128
        %p253 = pneg %p159
        %p254 = pneg %p156
        %s255 = smul.u32 2, %s22
        %p256 = scmp.lt.s32.totalorder %s21, 1
        %s257 = scalar_select %p256, %s21, 1
        %p258 = scmp.lt.s32.totalorder %s255, 1
        %s259 = scalar_select %p258, %s255, 1
        %s260 = smul.addr %s257, 2
        %s261 = sadd.s32 %s259, %s260
        %s262 = smul.addr %s261, 8
        %s263 = scalar_lea.vmem %s4, %s262
        %s264 = smul.u32 2, %s22
        %p265 = scmp.lt.s32.totalorder %s21, 1
        %s266 = scalar_select %p265, %s21, 1
        %p267 = scmp.lt.s32.totalorder %s264, 1
        %s268 = scalar_select %p267, %s264, 1
        %s269 = smul.addr %s266, 2
        %s270 = sadd.s32 %s268, %s269
        %s271 = smul.addr %s270, 8
        %s272 = scalar_lea.vmem %s1, %s271
        %s273 = smul.u32 2, %s22
        %p274 = scmp.lt.s32.totalorder %s23, 6
        %s275 = scalar_select %p274, %s23, 6
        %s276 = smul.addr %s275, 8
        %s277 = scalar_lea.vmem %s2, %s276
        %p278 = scmp.lt.s32.totalorder %s23, 6
        %s279 = scalar_select %p278, %s23, 6
        %s280 = smul.addr %s279, 8
        %s281 = scalar_lea.vmem %s3, %s280
        %s282 = smul.u32 2, %s22
        %p283 = scmp.lt.s32.totalorder %s21, 1
        %s284 = scalar_select %p283, %s21, 1
        %p285 = scmp.lt.s32.totalorder %s282, 1
        %s286 = scalar_select %p285, %s282, 1
        %s287 = smul.addr %s284, 2
        %s288 = sadd.s32 %s286, %s287
        %s289 = smul.addr %s288, 8
        %s290 = scalar_lea.vmem %s4, %s289
        %s291 = smul.u32 2, %s22
        %p292 = scmp.eq.s32.totalorder %s23, 0
        // Predicated region
        $region41: #{_sample_impl.1} parent=35 // pred_check
          %p293 = pneg %p292
        $region42: #{_sample_impl.1} parent=35 // pred_check_branch
          %295 = sbr.rel (%p293) target = $region44
        $region43: #{_sample_impl.1} parent=35 // pred_region
          %s296 = sld [smem:[#allocation3 + $0x7]]
          %v297 = vld [vmem:[%s272] sm:$0xff]
          %v298 = vld [vmem:[%s272 + $0x8] sm:$0xff]
          %v299 = vstv %s296
          %v300 = vmul.f32 %v299, %v297
          %v301 = vmul.f32 %v299, %v298
          %302 = vst [vmem:[%s290] sm:$0xff] %v300
          %303 = vst [vmem:[%s290 + $0x8] sm:$0xff] %v301
          %v304 = vld [vmem:[%s277] sm:$0xff]
          %v305 = vld [vmem:[%s281] sm:$0xff]
          %307 = vset.pattern.permute.xlu0 0
          %308 = vperm.xlu0 %307, %v305
          %v309 = vpop.permute.xlu0 %308
          %vm311 = vcmask 64512
          %v313 = vsel %vm311, %v304, 0
          %v315 = vand.u32 %v301, 4294901760
          %316 = vmatprep.subr.mxu0 %v315
          %v317 = vand.u32 %v300, 4294901760
          %318 = vmatpush1.msra.mxu0 %v317
          %319 = vmatprep.subr.mxu0 0.0
          %320 = vmatpush1.msra.mxu0 0.0
          %321 = vmatprep.subr.mxu0 0.0
          %322 = vmatpush1.msra.mxu0 0.0
          %323 = vmatprep.subr.mxu0 0.0
          %324 = vmatpush1.msra.mxu0 0.0
          %325 = vmatprep.subr.mxu0 0.0
          %326 = vmatpush1.msra.mxu0 0.0
          %327 = vmatprep.subr.mxu0 0.0
          %328 = vmatpush1.msra.mxu0 0.0
          %329 = vmatprep.subr.mxu0 0.0
          %330 = vmatpush1.msra.mxu0 0.0
          %331 = vmatprep.subr.mxu0 0.0
          %332 = vmatpush1.msra.mxu0 0.0
          %333 = vmatprep.subr.mxu0 0.0
          %334 = vmatpush1.msra.mxu0 0.0
          %335 = vmatprep.subr.mxu0 0.0
          %336 = vmatpush1.msra.mxu0 0.0
          %337 = vmatprep.subr.mxu0 0.0
          %338 = vmatpush1.msra.mxu0 0.0
          %339 = vmatprep.subr.mxu0 0.0
          %340 = vmatpush1.msra.mxu0 0.0
          %341 = vmatprep.subr.mxu0 0.0
          %342 = vmatpush1.msra.mxu0 0.0
          %343 = vmatprep.subr.mxu0 0.0
          %344 = vmatpush1.msra.mxu0 0.0
          %345 = vmatprep.subr.mxu0 0.0
          %346 = vmatpush1.msra.mxu0 0.0
          %347 = vmatprep.subr.mxu0 0.0
          %348 = vmatpush1.msra.mxu0 0.0
          %349 = vmatprep.subr.mxu0 0.0
          %350 = vmatpush1.msra.mxu0 0.0
          %351 = vmatprep.subr.mxu0 0.0
          %352 = vmatpush1.msra.mxu0 0.0
          %353 = vmatprep.subr.mxu0 0.0
          %354 = vmatpush1.msra.mxu0 0.0
          %355 = vmatprep.subr.mxu0 0.0
          %356 = vmatpush1.msra.mxu0 0.0
          %357 = vmatprep.subr.mxu0 0.0
          %358 = vmatpush1.msra.mxu0 0.0
          %359 = vmatprep.subr.mxu0 0.0
          %360 = vmatpush1.msra.mxu0 0.0
          %361 = vmatprep.subr.mxu0 0.0
          %362 = vmatpush1.msra.mxu0 0.0
          %363 = vmatprep.subr.mxu0 0.0
          %364 = vmatpush1.msra.mxu0 0.0
          %365 = vmatprep.subr.mxu0 0.0
          %366 = vmatpush1.msra.mxu0 0.0
          %367 = vmatprep.subr.mxu0 0.0
          %368 = vmatpush1.msra.mxu0 0.0
          %369 = vmatprep.subr.mxu0 0.0
          %370 = vmatpush1.msra.mxu0 0.0
          %371 = vmatprep.subr.mxu0 0.0
          %372 = vmatpush1.msra.mxu0 0.0
          %373 = vmatprep.subr.mxu0 0.0
          %374 = vmatpush1.msra.mxu0 0.0
          %375 = vmatprep.subr.mxu0 0.0
          %376 = vmatpush1.msra.mxu0 0.0
          %377 = vmatprep.subr.mxu0 0.0
          %378 = vmatpush1.msra.mxu0 0.0
          %379 = vmatprep.subr.mxu0 0.0
          %380 = vmatpush1.msra.mxu0 0.0
          %381 = vmatprep.mubr.f32.mxu0 0.0
          %v382 = vand.u32 %v313, 4294901760
          %v383 = vsub.f32 %v313, %v382
          %v384 = vand.u32 %v383, 4294901760
          %v385 = vsub.f32 %v383, %v384
          %v386 = vand.u32 %v385, 4294901760
          %387 = vmatmul.mubr.f32.gmra.mrb[0].mxu0 %v386
          %v388 = vpop.f32.mrb[0].mxu0
          %v389 = vadd.f32 %v309, %v388
          %v390 = vpop.f32.mrb[0].mxu0
          %v391 = vadd.f32 %v309, %v390
          %392 = vdwg.mxu0
          %v393 = vand.u32 %v301, 4294901760
          %v394 = vsub.f32 %v301, %v393
          %v395 = vand.u32 %v394, 4294901760
          %v396 = vsub.f32 %v394, %v395
          %v397 = vand.u32 %v396, 4294901760
          %398 = vmatprep.subr.mxu0 %v397
          %v399 = vand.u32 %v300, 4294901760
          %v400 = vsub.f32 %v300, %v399
          %v401 = vand.u32 %v400, 4294901760
          %v402 = vsub.f32 %v400, %v401
          %v403 = vand.u32 %v402, 4294901760
          %404 = vmatpush1.msra.mxu0 %v403
          %405 = vmatprep.subr.mxu0 0.0
          %406 = vmatpush1.msra.mxu0 0.0
          %407 = vmatprep.subr.mxu0 0.0
          %408 = vmatpush1.msra.mxu0 0.0
          %409 = vmatprep.subr.mxu0 0.0
          %410 = vmatpush1.msra.mxu0 0.0
          %411 = vmatprep.subr.mxu0 0.0
          %412 = vmatpush1.msra.mxu0 0.0
          %413 = vmatprep.subr.mxu0 0.0
          %414 = vmatpush1.msra.mxu0 0.0
          %415 = vmatprep.subr.mxu0 0.0
          %416 = vmatpush1.msra.mxu0 0.0
          %417 = vmatprep.subr.mxu0 0.0
          %418 = vmatpush1.msra.mxu0 0.0
          %419 = vmatprep.subr.mxu0 0.0
          %420 = vmatpush1.msra.mxu0 0.0
          %421 = vmatprep.subr.mxu0 0.0
          %422 = vmatpush1.msra.mxu0 0.0
          %423 = vmatprep.subr.mxu0 0.0
          %424 = vmatpush1.msra.mxu0 0.0
          %425 = vmatprep.subr.mxu0 0.0
          %426 = vmatpush1.msra.mxu0 0.0
          %427 = vmatprep.subr.mxu0 0.0
          %428 = vmatpush1.msra.mxu0 0.0
          %429 = vmatprep.subr.mxu0 0.0
          %430 = vmatpush1.msra.mxu0 0.0
          %431 = vmatprep.subr.mxu0 0.0
          %432 = vmatpush1.msra.mxu0 0.0
          %433 = vmatprep.subr.mxu0 0.0
          %434 = vmatpush1.msra.mxu0 0.0
          %435 = vmatprep.subr.mxu0 0.0
          %436 = vmatpush1.msra.mxu0 0.0
          %437 = vmatprep.subr.mxu0 0.0
          %438 = vmatpush1.msra.mxu0 0.0
          %439 = vmatprep.subr.mxu0 0.0
          %440 = vmatpush1.msra.mxu0 0.0
          %441 = vmatprep.subr.mxu0 0.0
          %442 = vmatpush1.msra.mxu0 0.0
          %443 = vmatprep.subr.mxu0 0.0
          %444 = vmatpush1.msra.mxu0 0.0
          %445 = vmatprep.subr.mxu0 0.0
          %446 = vmatpush1.msra.mxu0 0.0
          %447 = vmatprep.subr.mxu0 0.0
          %448 = vmatpush1.msra.mxu0 0.0
          %449 = vmatprep.subr.mxu0 0.0
          %450 = vmatpush1.msra.mxu0 0.0
          %451 = vmatprep.subr.mxu0 0.0
          %452 = vmatpush1.msra.mxu0 0.0
          %453 = vmatprep.subr.mxu0 0.0
          %454 = vmatpush1.msra.mxu0 0.0
          %455 = vmatprep.subr.mxu0 0.0
          %456 = vmatpush1.msra.mxu0 0.0
          %457 = vmatprep.subr.mxu0 0.0
          %458 = vmatpush1.msra.mxu0 0.0
          %459 = vmatprep.subr.mxu0 0.0
          %460 = vmatpush1.msra.mxu0 0.0
          %461 = vmatprep.subr.mxu0 0.0
          %462 = vmatpush1.msra.mxu0 0.0
          %463 = vmatprep.subr.mxu0 0.0
          %464 = vmatpush1.msra.mxu0 0.0
          %465 = vmatprep.subr.mxu0 0.0
          %466 = vmatpush1.msra.mxu0 0.0
          %467 = vmatprep.mubr.f32.mxu0 0.0
          %v468 = vand.u32 %v313, 4294901760
          %469 = vmatmul.mubr.f32.gmra.mrb[0].mxu0 %v468
          %v470 = vpop.f32.mrb[0].mxu0
          %v471 = vadd.f32 %v389, %v470
          %v472 = vpop.f32.mrb[0].mxu0
          %v473 = vadd.f32 %v391, %v472
          %474 = vdwg.mxu0
          %v475 = vand.u32 %v301, 4294901760
          %v476 = vsub.f32 %v301, %v475
          %477 = vmatprep.subr.mxu0 %v476
          %v478 = vand.u32 %v300, 4294901760
          %v479 = vsub.f32 %v300, %v478
          %480 = vmatpush1.msra.mxu0 %v479
          %481 = vmatprep.subr.mxu0 0.0
          %482 = vmatpush1.msra.mxu0 0.0
          %483 = vmatprep.subr.mxu0 0.0
          %484 = vmatpush1.msra.mxu0 0.0
          %485 = vmatprep.subr.mxu0 0.0
          %486 = vmatpush1.msra.mxu0 0.0
          %487 = vmatprep.subr.mxu0 0.0
          %488 = vmatpush1.msra.mxu0 0.0
          %489 = vmatprep.subr.mxu0 0.0
          %490 = vmatpush1.msra.mxu0 0.0
          %491 = vmatprep.subr.mxu0 0.0
          %492 = vmatpush1.msra.mxu0 0.0
          %493 = vmatprep.subr.mxu0 0.0
          %494 = vmatpush1.msra.mxu0 0.0
          %495 = vmatprep.subr.mxu0 0.0
          %496 = vmatpush1.msra.mxu0 0.0
          %497 = vmatprep.subr.mxu0 0.0
          %498 = vmatpush1.msra.mxu0 0.0
          %499 = vmatprep.subr.mxu0 0.0
          %500 = vmatpush1.msra.mxu0 0.0
          %501 = vmatprep.subr.mxu0 0.0
          %502 = vmatpush1.msra.mxu0 0.0
          %503 = vmatprep.subr.mxu0 0.0
          %504 = vmatpush1.msra.mxu0 0.0
          %505 = vmatprep.subr.mxu0 0.0
          %506 = vmatpush1.msra.mxu0 0.0
          %507 = vmatprep.subr.mxu0 0.0
          %508 = vmatpush1.msra.mxu0 0.0
          %509 = vmatprep.subr.mxu0 0.0
          %510 = vmatpush1.msra.mxu0 0.0
          %511 = vmatprep.subr.mxu0 0.0
          %512 = vmatpush1.msra.mxu0 0.0
          %513 = vmatprep.subr.mxu0 0.0
          %514 = vmatpush1.msra.mxu0 0.0
          %515 = vmatprep.subr.mxu0 0.0
          %516 = vmatpush1.msra.mxu0 0.0
          %517 = vmatprep.subr.mxu0 0.0
          %518 = vmatpush1.msra.mxu0 0.0
          %519 = vmatprep.subr.mxu0 0.0
          %520 = vmatpush1.msra.mxu0 0.0
          %521 = vmatprep.subr.mxu0 0.0
          %522 = vmatpush1.msra.mxu0 0.0
          %523 = vmatprep.subr.mxu0 0.0
          %524 = vmatpush1.msra.mxu0 0.0
          %525 = vmatprep.subr.mxu0 0.0
          %526 = vmatpush1.msra.mxu0 0.0
          %527 = vmatprep.subr.mxu0 0.0
          %528 = vmatpush1.msra.mxu0 0.0
          %529 = vmatprep.subr.mxu0 0.0
          %530 = vmatpush1.msra.mxu0 0.0
          %531 = vmatprep.subr.mxu0 0.0
          %532 = vmatpush1.msra.mxu0 0.0
          %533 = vmatprep.subr.mxu0 0.0
          %534 = vmatpush1.msra.mxu0 0.0
          %535 = vmatprep.subr.mxu0 0.0
          %536 = vmatpush1.msra.mxu0 0.0
          %537 = vmatprep.subr.mxu0 0.0
          %538 = vmatpush1.msra.mxu0 0.0
          %539 = vmatprep.subr.mxu0 0.0
          %540 = vmatpush1.msra.mxu0 0.0
          %541 = vmatprep.subr.mxu0 0.0
          %542 = vmatpush1.msra.mxu0 0.0
          %543 = vmatprep.mubr.f32.mxu0 0.0
          %v544 = vand.u32 %v313, 4294901760
          %v545 = vsub.f32 %v313, %v544
          %546 = vmatmul.mubr.f32.gmra.mrb[0].mxu0 %v545
          %v547 = vpop.f32.mrb[0].mxu0
          %v548 = vadd.f32 %v471, %v547
          %v549 = vpop.f32.mrb[0].mxu0
          %v550 = vadd.f32 %v473, %v549
          %551 = vdwg.mxu0
          %v552 = vand.u32 %v301, 4294901760
          %553 = vmatprep.subr.mxu0 %v552
          %v554 = vand.u32 %v300, 4294901760
          %555 = vmatpush1.msra.mxu0 %v554
          %556 = vmatprep.subr.mxu0 0.0
          %557 = vmatpush1.msra.mxu0 0.0
          %558 = vmatprep.subr.mxu0 0.0
          %559 = vmatpush1.msra.mxu0 0.0
          %560 = vmatprep.subr.mxu0 0.0
          %561 = vmatpush1.msra.mxu0 0.0
          %562 = vmatprep.subr.mxu0 0.0
          %563 = vmatpush1.msra.mxu0 0.0
          %564 = vmatprep.subr.mxu0 0.0
          %565 = vmatpush1.msra.mxu0 0.0
          %566 = vmatprep.subr.mxu0 0.0
          %567 = vmatpush1.msra.mxu0 0.0
          %568 = vmatprep.subr.mxu0 0.0
          %569 = vmatpush1.msra.mxu0 0.0
          %570 = vmatprep.subr.mxu0 0.0
          %571 = vmatpush1.msra.mxu0 0.0
          %572 = vmatprep.subr.mxu0 0.0
          %573 = vmatpush1.msra.mxu0 0.0
          %574 = vmatprep.subr.mxu0 0.0
          %575 = vmatpush1.msra.mxu0 0.0
          %576 = vmatprep.subr.mxu0 0.0
          %577 = vmatpush1.msra.mxu0 0.0
          %578 = vmatprep.subr.mxu0 0.0
          %579 = vmatpush1.msra.mxu0 0.0
          %580 = vmatprep.subr.mxu0 0.0
          %581 = vmatpush1.msra.mxu0 0.0
          %582 = vmatprep.subr.mxu0 0.0
          %583 = vmatpush1.msra.mxu0 0.0
          %584 = vmatprep.subr.mxu0 0.0
          %585 = vmatpush1.msra.mxu0 0.0
          %586 = vmatprep.subr.mxu0 0.0
          %587 = vmatpush1.msra.mxu0 0.0
          %588 = vmatprep.subr.mxu0 0.0
          %589 = vmatpush1.msra.mxu0 0.0
          %590 = vmatprep.subr.mxu0 0.0
          %591 = vmatpush1.msra.mxu0 0.0
          %592 = vmatprep.subr.mxu0 0.0
          %593 = vmatpush1.msra.mxu0 0.0
          %594 = vmatprep.subr.mxu0 0.0
          %595 = vmatpush1.msra.mxu0 0.0
          %596 = vmatprep.subr.mxu0 0.0
          %597 = vmatpush1.msra.mxu0 0.0
          %598 = vmatprep.subr.mxu0 0.0
          %599 = vmatpush1.msra.mxu0 0.0
          %600 = vmatprep.subr.mxu0 0.0
          %601 = vmatpush1.msra.mxu0 0.0
          %602 = vmatprep.subr.mxu0 0.0
          %603 = vmatpush1.msra.mxu0 0.0
          %604 = vmatprep.subr.mxu0 0.0
          %605 = vmatpush1.msra.mxu0 0.0
          %606 = vmatprep.subr.mxu0 0.0
          %607 = vmatpush1.msra.mxu0 0.0
          %608 = vmatprep.subr.mxu0 0.0
          %609 = vmatpush1.msra.mxu0 0.0
          %610 = vmatprep.subr.mxu0 0.0
          %611 = vmatpush1.msra.mxu0 0.0
          %612 = vmatprep.subr.mxu0 0.0
          %613 = vmatpush1.msra.mxu0 0.0
          %614 = vmatprep.subr.mxu0 0.0
          %615 = vmatpush1.msra.mxu0 0.0
          %616 = vmatprep.subr.mxu0 0.0
          %617 = vmatpush1.msra.mxu0 0.0
          %618 = vmatprep.mubr.f32.mxu0 0.0
          %v619 = vand.u32 %v313, 4294901760
          %v620 = vsub.f32 %v313, %v619
          %v621 = vand.u32 %v620, 4294901760
          %622 = vmatmul.mubr.f32.gmra.mrb[0].mxu0 %v621
          %v623 = vpop.f32.mrb[0].mxu0
          %v624 = vadd.f32 %v548, %v623
          %v625 = vpop.f32.mrb[0].mxu0
          %v626 = vadd.f32 %v550, %v625
          %627 = vdwg.mxu0
          %v628 = vand.u32 %v301, 4294901760
          %v629 = vsub.f32 %v301, %v628
          %v630 = vand.u32 %v629, 4294901760
          %631 = vmatprep.subr.mxu0 %v630
          %v632 = vand.u32 %v300, 4294901760
          %v633 = vsub.f32 %v300, %v632
          %v634 = vand.u32 %v633, 4294901760
          %635 = vmatpush1.msra.mxu0 %v634
          %636 = vmatprep.subr.mxu0 0.0
          %637 = vmatpush1.msra.mxu0 0.0
          %638 = vmatprep.subr.mxu0 0.0
          %639 = vmatpush1.msra.mxu0 0.0
          %640 = vmatprep.subr.mxu0 0.0
          %641 = vmatpush1.msra.mxu0 0.0
          %642 = vmatprep.subr.mxu0 0.0
          %643 = vmatpush1.msra.mxu0 0.0
          %644 = vmatprep.subr.mxu0 0.0
          %645 = vmatpush1.msra.mxu0 0.0
          %646 = vmatprep.subr.mxu0 0.0
          %647 = vmatpush1.msra.mxu0 0.0
          %648 = vmatprep.subr.mxu0 0.0
          %649 = vmatpush1.msra.mxu0 0.0
          %650 = vmatprep.subr.mxu0 0.0
          %651 = vmatpush1.msra.mxu0 0.0
          %652 = vmatprep.subr.mxu0 0.0
          %653 = vmatpush1.msra.mxu0 0.0
          %654 = vmatprep.subr.mxu0 0.0
          %655 = vmatpush1.msra.mxu0 0.0
          %656 = vmatprep.subr.mxu0 0.0
          %657 = vmatpush1.msra.mxu0 0.0
          %658 = vmatprep.subr.mxu0 0.0
          %659 = vmatpush1.msra.mxu0 0.0
          %660 = vmatprep.subr.mxu0 0.0
          %661 = vmatpush1.msra.mxu0 0.0
          %662 = vmatprep.subr.mxu0 0.0
          %663 = vmatpush1.msra.mxu0 0.0
          %664 = vmatprep.subr.mxu0 0.0
          %665 = vmatpush1.msra.mxu0 0.0
          %666 = vmatprep.subr.mxu0 0.0
          %667 = vmatpush1.msra.mxu0 0.0
          %668 = vmatprep.subr.mxu0 0.0
          %669 = vmatpush1.msra.mxu0 0.0
          %670 = vmatprep.subr.mxu0 0.0
          %671 = vmatpush1.msra.mxu0 0.0
          %672 = vmatprep.subr.mxu0 0.0
          %673 = vmatpush1.msra.mxu0 0.0
          %674 = vmatprep.subr.mxu0 0.0
          %675 = vmatpush1.msra.mxu0 0.0
          %676 = vmatprep.subr.mxu0 0.0
          %677 = vmatpush1.msra.mxu0 0.0
          %678 = vmatprep.subr.mxu0 0.0
          %679 = vmatpush1.msra.mxu0 0.0
          %680 = vmatprep.subr.mxu0 0.0
          %681 = vmatpush1.msra.mxu0 0.0
          %682 = vmatprep.subr.mxu0 0.0
          %683 = vmatpush1.msra.mxu0 0.0
          %684 = vmatprep.subr.mxu0 0.0
          %685 = vmatpush1.msra.mxu0 0.0
          %686 = vmatprep.subr.mxu0 0.0
          %687 = vmatpush1.msra.mxu0 0.0
          %688 = vmatprep.subr.mxu0 0.0
          %689 = vmatpush1.msra.mxu0 0.0
          %690 = vmatprep.subr.mxu0 0.0
          %691 = vmatpush1.msra.mxu0 0.0
          %692 = vmatprep.subr.mxu0 0.0
          %693 = vmatpush1.msra.mxu0 0.0
          %694 = vmatprep.subr.mxu0 0.0
          %695 = vmatpush1.msra.mxu0 0.0
          %696 = vmatprep.subr.mxu0 0.0
          %697 = vmatpush1.msra.mxu0 0.0
          %698 = vmatprep.mubr.f32.mxu0 0.0
          %v699 = vand.u32 %v313, 4294901760
          %700 = vmatmul.mubr.f32.gmra.mrb[0].mxu0 %v699
          %v701 = vpop.f32.mrb[0].mxu0
          %v702 = vadd.f32 %v624, %v701
          %v703 = vpop.f32.mrb[0].mxu0
          %v704 = vadd.f32 %v626, %v703
          %705 = vdwg.mxu0
          %v706 = vand.u32 %v301, 4294901760
          %707 = vmatprep.subr.mxu0 %v706
          %v708 = vand.u32 %v300, 4294901760
          %709 = vmatpush1.msra.mxu0 %v708
          %710 = vmatprep.subr.mxu0 0.0
          %711 = vmatpush1.msra.mxu0 0.0
          %712 = vmatprep.subr.mxu0 0.0
          %713 = vmatpush1.msra.mxu0 0.0
          %714 = vmatprep.subr.mxu0 0.0
          %715 = vmatpush1.msra.mxu0 0.0
          %716 = vmatprep.subr.mxu0 0.0
          %717 = vmatpush1.msra.mxu0 0.0
          %718 = vmatprep.subr.mxu0 0.0
          %719 = vmatpush1.msra.mxu0 0.0
          %720 = vmatprep.subr.mxu0 0.0
          %721 = vmatpush1.msra.mxu0 0.0
          %722 = vmatprep.subr.mxu0 0.0
          %723 = vmatpush1.msra.mxu0 0.0
          %724 = vmatprep.subr.mxu0 0.0
          %725 = vmatpush1.msra.mxu0 0.0
          %726 = vmatprep.subr.mxu0 0.0
          %727 = vmatpush1.msra.mxu0 0.0
          %728 = vmatprep.subr.mxu0 0.0
          %729 = vmatpush1.msra.mxu0 0.0
          %730 = vmatprep.subr.mxu0 0.0
          %731 = vmatpush1.msra.mxu0 0.0
          %732 = vmatprep.subr.mxu0 0.0
          %733 = vmatpush1.msra.mxu0 0.0
          %734 = vmatprep.subr.mxu0 0.0
          %735 = vmatpush1.msra.mxu0 0.0
          %736 = vmatprep.subr.mxu0 0.0
          %737 = vmatpush1.msra.mxu0 0.0
          %738 = vmatprep.subr.mxu0 0.0
          %739 = vmatpush1.msra.mxu0 0.0
          %740 = vmatprep.subr.mxu0 0.0
          %741 = vmatpush1.msra.mxu0 0.0
          %742 = vmatprep.subr.mxu0 0.0
          %743 = vmatpush1.msra.mxu0 0.0
          %744 = vmatprep.subr.mxu0 0.0
          %745 = vmatpush1.msra.mxu0 0.0
          %746 = vmatprep.subr.mxu0 0.0
          %747 = vmatpush1.msra.mxu0 0.0
          %748 = vmatprep.subr.mxu0 0.0
          %749 = vmatpush1.msra.mxu0 0.0
          %750 = vmatprep.subr.mxu0 0.0
          %751 = vmatpush1.msra.mxu0 0.0
          %752 = vmatprep.subr.mxu0 0.0
          %753 = vmatpush1.msra.mxu0 0.0
          %754 = vmatprep.subr.mxu0 0.0
          %755 = vmatpush1.msra.mxu0 0.0
          %756 = vmatprep.subr.mxu0 0.0
          %757 = vmatpush1.msra.mxu0 0.0
          %758 = vmatprep.subr.mxu0 0.0
          %759 = vmatpush1.msra.mxu0 0.0
          %760 = vmatprep.subr.mxu0 0.0
          %761 = vmatpush1.msra.mxu0 0.0
          %762 = vmatprep.subr.mxu0 0.0
          %763 = vmatpush1.msra.mxu0 0.0
          %764 = vmatprep.subr.mxu0 0.0
          %765 = vmatpush1.msra.mxu0 0.0
          %766 = vmatprep.subr.mxu0 0.0
          %767 = vmatpush1.msra.mxu0 0.0
          %768 = vmatprep.subr.mxu0 0.0
          %769 = vmatpush1.msra.mxu0 0.0
          %770 = vmatprep.subr.mxu0 0.0
          %771 = vmatpush1.msra.mxu0 0.0
          %772 = vmatprep.mubr.f32.mxu0 0.0
          %v773 = vand.u32 %v313, 4294901760
          %774 = vmatmul.mubr.f32.gmra.mrb[0].mxu0 %v773
          %v775 = vpop.f32.mrb[0].mxu0
          %v776 = vadd.f32 %v702, %v775
          %v777 = vpop.f32.mrb[0].mxu0
          %v778 = vadd.f32 %v704, %v777
          %779 = vdwg.mxu0
          %780 = vst [vmem:[#allocation2] sm:$0xff] %v776
          %781 = vst [vmem:[#allocation2 + $0x8] sm:$0xff] %v778
          %s782 = scalar_lea.vmem [#allocation2], 16
          %783 = vst [vmem:[%s782] sm:$0xff] %v776
          %784 = vst [vmem:[%s782 + $0x8] sm:$0xff] %v778
        $region44: #{_sample_impl.1} parent=35 // pred_fallthru
          _
        %p785 = scmp.gt.s32.totalorder %s23, 0
        // Predicated region
        $region45: #{_sample_impl.1} parent=35 // pred_check
          %p786 = pneg %p785
        $region46: #{_sample_impl.1} parent=35 // pred_check_branch
          %788 = sbr.rel (%p786) target = $region48
        $region47: #{_sample_impl.1} parent=35 // pred_region
          %s789 = smul.u32 %s23, 128
          %s790 = sld [smem:[#allocation3 + %s789]]
          %s791 = sadd.s32 %s789, 1
          %s792 = sld [smem:[#allocation3 + %s791]]
          %s793 = sadd.s32 %s789, 2
          %s794 = sld [smem:[#allocation3 + %s793]]
          %s795 = sadd.s32 %s789, 3
          %s796 = sld [smem:[#allocation3 + %s795]]
          %s797 = ssub.s32 %s23, 1
          %s798 = sand.u32 %s797, 1
          %s799 = sand.u32 %s23, 1
          %v800 = vld [vmem:[%s290] sm:$0xff]
          %v801 = vld [vmem:[%s290 + $0x8] sm:$0xff]
          %s802 = smul.u32 %s798, 2
          %s803 = smul.addr %s802, 8
          %s804 = scalar_lea.vmem [#allocation2], %s803
          %v805 = vld [vmem:[%s804] sm:$0xff]
          %v806 = vld [vmem:[%s804 + $0x8] sm:$0xff]
          %s807 = smul.u32 %s799, 2
          %s808 = smul.addr %s807, 8
          %s809 = scalar_lea.vmem [#allocation2], %s808
          %v810 = vld [vmem:[%s809] sm:$0xff]
          %v811 = vld [vmem:[%s809 + $0x8] sm:$0xff]
          %v812 = vsub.f32 %v810, %v805
          %v813 = vsub.f32 %v811, %v806
          %v814 = vstv %s790
          %v815 = vmul.f32 %v814, %v812
          %v816 = vmul.f32 %v814, %v813
          %v817 = vstv %s792
          %v818 = vmul.f32 %v817, %v800
          %v819 = vmul.f32 %v817, %v801
          %v820 = vstv %s794
          %v821 = vmul.f32 %v820, %v805
          %v822 = vmul.f32 %v820, %v806
          %v823 = vadd.f32 %v818, %v821
          %v824 = vadd.f32 %v819, %v822
          %v825 = vstv %s796
          %v826 = vmul.f32 %v825, %v815
          %v827 = vmul.f32 %v825, %v816
          %v828 = vadd.f32 %v823, %v826
          %v829 = vadd.f32 %v824, %v827
          %p830 = scmp.lt.s32.totalorder %s23, 6
          // Predicated region
          $region49: #{_sample_impl.1} parent=47 // pred_check
            %p831 = pneg %p830
          $region50: #{_sample_impl.1} parent=47 // pred_check_branch
            %833 = sbr.rel (%p831) target = $region52
          $region51: #{_sample_impl.1} parent=47 // pred_region
            %s834 = sadd.s32 %s789, 4
            %s835 = sld [smem:[#allocation3 + %s834]]
            %s836 = sadd.s32 %s789, 5
            %s837 = sld [smem:[#allocation3 + %s836]]
            %s838 = sadd.s32 %s789, 6
            %s839 = sld [smem:[#allocation3 + %s838]]
            %v840 = vld [vmem:[%s277] sm:$0xff]
            %v841 = vld [vmem:[%s281] sm:$0xff]
            %843 = vset.pattern.permute.xlu0 0
            %844 = vperm.xlu0 %843, %v841
            %v845 = vpop.permute.xlu0 %844
            %vm847 = vcmask 64512
            %v849 = vsel %vm847, %v840, 0
            %v851 = vand.u32 %v829, 4294901760
            %852 = vmatprep.subr.mxu0 %v851
            %v853 = vand.u32 %v828, 4294901760
            %854 = vmatpush1.msra.mxu0 %v853
            %855 = vmatprep.subr.mxu0 0.0
            %856 = vmatpush1.msra.mxu0 0.0
            %857 = vmatprep.subr.mxu0 0.0
            %858 = vmatpush1.msra.mxu0 0.0
            %859 = vmatprep.subr.mxu0 0.0
            %860 = vmatpush1.msra.mxu0 0.0
            %861 = vmatprep.subr.mxu0 0.0
            %862 = vmatpush1.msra.mxu0 0.0
            %863 = vmatprep.subr.mxu0 0.0
            %864 = vmatpush1.msra.mxu0 0.0
            %865 = vmatprep.subr.mxu0 0.0
            %866 = vmatpush1.msra.mxu0 0.0
            %867 = vmatprep.subr.mxu0 0.0
            %868 = vmatpush1.msra.mxu0 0.0
            %869 = vmatprep.subr.mxu0 0.0
            %870 = vmatpush1.msra.mxu0 0.0
            %871 = vmatprep.subr.mxu0 0.0
            %872 = vmatpush1.msra.mxu0 0.0
            %873 = vmatprep.subr.mxu0 0.0
            %874 = vmatpush1.msra.mxu0 0.0
            %875 = vmatprep.subr.mxu0 0.0
            %876 = vmatpush1.msra.mxu0 0.0
            %877 = vmatprep.subr.mxu0 0.0
            %878 = vmatpush1.msra.mxu0 0.0
            %879 = vmatprep.subr.mxu0 0.0
            %880 = vmatpush1.msra.mxu0 0.0
            %881 = vmatprep.subr.mxu0 0.0
            %882 = vmatpush1.msra.mxu0 0.0
            %883 = vmatprep.subr.mxu0 0.0
            %884 = vmatpush1.msra.mxu0 0.0
            %885 = vmatprep.subr.mxu0 0.0
            %886 = vmatpush1.msra.mxu0 0.0
            %887 = vmatprep.subr.mxu0 0.0
            %888 = vmatpush1.msra.mxu0 0.0
            %889 = vmatprep.subr.mxu0 0.0
            %890 = vmatpush1.msra.mxu0 0.0
            %891 = vmatprep.subr.mxu0 0.0
            %892 = vmatpush1.msra.mxu0 0.0
            %893 = vmatprep.subr.mxu0 0.0
            %894 = vmatpush1.msra.mxu0 0.0
            %895 = vmatprep.subr.mxu0 0.0
            %896 = vmatpush1.msra.mxu0 0.0
            %897 = vmatprep.subr.mxu0 0.0
            %898 = vmatpush1.msra.mxu0 0.0
            %899 = vmatprep.subr.mxu0 0.0
            %900 = vmatpush1.msra.mxu0 0.0
            %901 = vmatprep.subr.mxu0 0.0
            %902 = vmatpush1.msra.mxu0 0.0
            %903 = vmatprep.subr.mxu0 0.0
            %904 = vmatpush1.msra.mxu0 0.0
            %905 = vmatprep.subr.mxu0 0.0
            %906 = vmatpush1.msra.mxu0 0.0
            %907 = vmatprep.subr.mxu0 0.0
            %908 = vmatpush1.msra.mxu0 0.0
            %909 = vmatprep.subr.mxu0 0.0
            %910 = vmatpush1.msra.mxu0 0.0
            %911 = vmatprep.subr.mxu0 0.0
            %912 = vmatpush1.msra.mxu0 0.0
            %913 = vmatprep.subr.mxu0 0.0
            %914 = vmatpush1.msra.mxu0 0.0
            %915 = vmatprep.subr.mxu0 0.0
            %916 = vmatpush1.msra.mxu0 0.0
            %917 = vmatprep.mubr.f32.mxu0 0.0
            %v918 = vand.u32 %v849, 4294901760
            %v919 = vsub.f32 %v849, %v918
            %v920 = vand.u32 %v919, 4294901760
            %v921 = vsub.f32 %v919, %v920
            %v922 = vand.u32 %v921, 4294901760
            %923 = vmatmul.mubr.f32.gmra.mrb[0].mxu0 %v922
            %v924 = vpop.f32.mrb[0].mxu0
            %v925 = vadd.f32 %v845, %v924
            %v926 = vpop.f32.mrb[0].mxu0
            %v927 = vadd.f32 %v845, %v926
            %928 = vdwg.mxu0
            %v929 = vand.u32 %v829, 4294901760
            %v930 = vsub.f32 %v829, %v929
            %v931 = vand.u32 %v930, 4294901760
            %v932 = vsub.f32 %v930, %v931
            %v933 = vand.u32 %v932, 4294901760
            %934 = vmatprep.subr.mxu0 %v933
            %v935 = vand.u32 %v828, 4294901760
            %v936 = vsub.f32 %v828, %v935
            %v937 = vand.u32 %v936, 4294901760
            %v938 = vsub.f32 %v936, %v937
            %v939 = vand.u32 %v938, 4294901760
            %940 = vmatpush1.msra.mxu0 %v939
            %941 = vmatprep.subr.mxu0 0.0
            %942 = vmatpush1.msra.mxu0 0.0
            %943 = vmatprep.subr.mxu0 0.0
            %944 = vmatpush1.msra.mxu0 0.0
            %945 = vmatprep.subr.mxu0 0.0
            %946 = vmatpush1.msra.mxu0 0.0
            %947 = vmatprep.subr.mxu0 0.0
            %948 = vmatpush1.msra.mxu0 0.0
            %949 = vmatprep.subr.mxu0 0.0
            %950 = vmatpush1.msra.mxu0 0.0
            %951 = vmatprep.subr.mxu0 0.0
            %952 = vmatpush1.msra.mxu0 0.0
            %953 = vmatprep.subr.mxu0 0.0
            %954 = vmatpush1.msra.mxu0 0.0
            %955 = vmatprep.subr.mxu0 0.0
            %956 = vmatpush1.msra.mxu0 0.0
            %957 = vmatprep.subr.mxu0 0.0
            %958 = vmatpush1.msra.mxu0 0.0
            %959 = vmatprep.subr.mxu0 0.0
            %960 = vmatpush1.msra.mxu0 0.0
            %961 = vmatprep.subr.mxu0 0.0
            %962 = vmatpush1.msra.mxu0 0.0
            %963 = vmatprep.subr.mxu0 0.0
            %964 = vmatpush1.msra.mxu0 0.0
            %965 = vmatprep.subr.mxu0 0.0
            %966 = vmatpush1.msra.mxu0 0.0
            %967 = vmatprep.subr.mxu0 0.0
            %968 = vmatpush1.msra.mxu0 0.0
            %969 = vmatprep.subr.mxu0 0.0
            %970 = vmatpush1.msra.mxu0 0.0
            %971 = vmatprep.subr.mxu0 0.0
            %972 = vmatpush1.msra.mxu0 0.0
            %973 = vmatprep.subr.mxu0 0.0
            %974 = vmatpush1.msra.mxu0 0.0
            %975 = vmatprep.subr.mxu0 0.0
            %976 = vmatpush1.msra.mxu0 0.0
            %977 = vmatprep.subr.mxu0 0.0
            %978 = vmatpush1.msra.mxu0 0.0
            %979 = vmatprep.subr.mxu0 0.0
            %980 = vmatpush1.msra.mxu0 0.0
            %981 = vmatprep.subr.mxu0 0.0
            %982 = vmatpush1.msra.mxu0 0.0
            %983 = vmatprep.subr.mxu0 0.0
            %984 = vmatpush1.msra.mxu0 0.0
            %985 = vmatprep.subr.mxu0 0.0
            %986 = vmatpush1.msra.mxu0 0.0
            %987 = vmatprep.subr.mxu0 0.0
            %988 = vmatpush1.msra.mxu0 0.0
            %989 = vmatprep.subr.mxu0 0.0
            %990 = vmatpush1.msra.mxu0 0.0
            %991 = vmatprep.subr.mxu0 0.0
            %992 = vmatpush1.msra.mxu0 0.0
            %993 = vmatprep.subr.mxu0 0.0
            %994 = vmatpush1.msra.mxu0 0.0
            %995 = vmatprep.subr.mxu0 0.0
            %996 = vmatpush1.msra.mxu0 0.0
            %997 = vmatprep.subr.mxu0 0.0
            %998 = vmatpush1.msra.mxu0 0.0
            %999 = vmatprep.subr.mxu0 0.0
            %1000 = vmatpush1.msra.mxu0 0.0
            %1001 = vmatprep.subr.mxu0 0.0
            %1002 = vmatpush1.msra.mxu0 0.0
            %1003 = vmatprep.mubr.f32.mxu0 0.0
            %v1004 = vand.u32 %v849, 4294901760
            %1005 = vmatmul.mubr.f32.gmra.mrb[0].mxu0 %v1004
            %v1006 = vpop.f32.mrb[0].mxu0
            %v1007 = vadd.f32 %v925, %v1006
            %v1008 = vpop.f32.mrb[0].mxu0
            %v1009 = vadd.f32 %v927, %v1008
            %1010 = vdwg.mxu0
            %v1011 = vand.u32 %v829, 4294901760
            %v1012 = vsub.f32 %v829, %v1011
            %1013 = vmatprep.subr.mxu0 %v1012
            %v1014 = vand.u32 %v828, 4294901760
            %v1015 = vsub.f32 %v828, %v1014
            %1016 = vmatpush1.msra.mxu0 %v1015
            %1017 = vmatprep.subr.mxu0 0.0
            %1018 = vmatpush1.msra.mxu0 0.0
            %1019 = vmatprep.subr.mxu0 0.0
            %1020 = vmatpush1.msra.mxu0 0.0
            %1021 = vmatprep.subr.mxu0 0.0
            %1022 = vmatpush1.msra.mxu0 0.0
            %1023 = vmatprep.subr.mxu0 0.0
            %1024 = vmatpush1.msra.mxu0 0.0
            %1025 = vmatprep.subr.mxu0 0.0
            %1026 = vmatpush1.msra.mxu0 0.0
            %1027 = vmatprep.subr.mxu0 0.0
            %1028 = vmatpush1.msra.mxu0 0.0
            %1029 = vmatprep.subr.mxu0 0.0
            %1030 = vmatpush1.msra.mxu0 0.0
            %1031 = vmatprep.subr.mxu0 0.0
            %1032 = vmatpush1.msra.mxu0 0.0
            %1033 = vmatprep.subr.mxu0 0.0
            %1034 = vmatpush1.msra.mxu0 0.0
            %1035 = vmatprep.subr.mxu0 0.0
            %1036 = vmatpush1.msra.mxu0 0.0
            %1037 = vmatprep.subr.mxu0 0.0
            %1038 = vmatpush1.msra.mxu0 0.0
            %1039 = vmatprep.subr.mxu0 0.0
            %1040 = vmatpush1.msra.mxu0 0.0
            %1041 = vmatprep.subr.mxu0 0.0
            %1042 = vmatpush1.msra.mxu0 0.0
            %1043 = vmatprep.subr.mxu0 0.0
            %1044 = vmatpush1.msra.mxu0 0.0
            %1045 = vmatprep.subr.mxu0 0.0
            %1046 = vmatpush1.msra.mxu0 0.0
            %1047 = vmatprep.subr.mxu0 0.0
            %1048 = vmatpush1.msra.mxu0 0.0
            %1049 = vmatprep.subr.mxu0 0.0
            %1050 = vmatpush1.msra.mxu0 0.0
            %1051 = vmatprep.subr.mxu0 0.0
            %1052 = vmatpush1.msra.mxu0 0.0
            %1053 = vmatprep.subr.mxu0 0.0
            %1054 = vmatpush1.msra.mxu0 0.0
            %1055 = vmatprep.subr.mxu0 0.0
            %1056 = vmatpush1.msra.mxu0 0.0
            %1057 = vmatprep.subr.mxu0 0.0
            %1058 = vmatpush1.msra.mxu0 0.0
            %1059 = vmatprep.subr.mxu0 0.0
            %1060 = vmatpush1.msra.mxu0 0.0
            %1061 = vmatprep.subr.mxu0 0.0
            %1062 = vmatpush1.msra.mxu0 0.0
            %1063 = vmatprep.subr.mxu0 0.0
            %1064 = vmatpush1.msra.mxu0 0.0
            %1065 = vmatprep.subr.mxu0 0.0
            %1066 = vmatpush1.msra.mxu0 0.0
            %1067 = vmatprep.subr.mxu0 0.0
            %1068 = vmatpush1.msra.mxu0 0.0
            %1069 = vmatprep.subr.mxu0 0.0
            %1070 = vmatpush1.msra.mxu0 0.0
            %1071 = vmatprep.subr.mxu0 0.0
            %1072 = vmatpush1.msra.mxu0 0.0
            %1073 = vmatprep.subr.mxu0 0.0
            %1074 = vmatpush1.msra.mxu0 0.0
            %1075 = vmatprep.subr.mxu0 0.0
            %1076 = vmatpush1.msra.mxu0 0.0
            %1077 = vmatprep.subr.mxu0 0.0
            %1078 = vmatpush1.msra.mxu0 0.0
            %1079 = vmatprep.mubr.f32.mxu0 0.0
            %v1080 = vand.u32 %v849, 4294901760
            %v1081 = vsub.f32 %v849, %v1080
            %1082 = vmatmul.mubr.f32.gmra.mrb[0].mxu0 %v1081
            %v1083 = vpop.f32.mrb[0].mxu0
            %v1084 = vadd.f32 %v1007, %v1083
            %v1085 = vpop.f32.mrb[0].mxu0
            %v1086 = vadd.f32 %v1009, %v1085
            %1087 = vdwg.mxu0
            %v1088 = vand.u32 %v829, 4294901760
            %1089 = vmatprep.subr.mxu0 %v1088
            %v1090 = vand.u32 %v828, 4294901760
            %1091 = vmatpush1.msra.mxu0 %v1090
            %1092 = vmatprep.subr.mxu0 0.0
            %1093 = vmatpush1.msra.mxu0 0.0
            %1094 = vmatprep.subr.mxu0 0.0
            %1095 = vmatpush1.msra.mxu0 0.0
            %1096 = vmatprep.subr.mxu0 0.0
            %1097 = vmatpush1.msra.mxu0 0.0
            %1098 = vmatprep.subr.mxu0 0.0
            %1099 = vmatpush1.msra.mxu0 0.0
            %1100 = vmatprep.subr.mxu0 0.0
            %1101 = vmatpush1.msra.mxu0 0.0
            %1102 = vmatprep.subr.mxu0 0.0
            %1103 = vmatpush1.msra.mxu0 0.0
            %1104 = vmatprep.subr.mxu0 0.0
            %1105 = vmatpush1.msra.mxu0 0.0
            %1106 = vmatprep.subr.mxu0 0.0
            %1107 = vmatpush1.msra.mxu0 0.0
            %1108 = vmatprep.subr.mxu0 0.0
            %1109 = vmatpush1.msra.mxu0 0.0
            %1110 = vmatprep.subr.mxu0 0.0
            %1111 = vmatpush1.msra.mxu0 0.0
            %1112 = vmatprep.subr.mxu0 0.0
            %1113 = vmatpush1.msra.mxu0 0.0
            %1114 = vmatprep.subr.mxu0 0.0
            %1115 = vmatpush1.msra.mxu0 0.0
            %1116 = vmatprep.subr.mxu0 0.0
            %1117 = vmatpush1.msra.mxu0 0.0
            %1118 = vmatprep.subr.mxu0 0.0
            %1119 = vmatpush1.msra.mxu0 0.0
            %1120 = vmatprep.subr.mxu0 0.0
            %1121 = vmatpush1.msra.mxu0 0.0
            %1122 = vmatprep.subr.mxu0 0.0
            %1123 = vmatpush1.msra.mxu0 0.0
            %1124 = vmatprep.subr.mxu0 0.0
            %1125 = vmatpush1.msra.mxu0 0.0
            %1126 = vmatprep.subr.mxu0 0.0
            %1127 = vmatpush1.msra.mxu0 0.0
            %1128 = vmatprep.subr.mxu0 0.0
            %1129 = vmatpush1.msra.mxu0 0.0
            %1130 = vmatprep.subr.mxu0 0.0
            %1131 = vmatpush1.msra.mxu0 0.0
            %1132 = vmatprep.subr.mxu0 0.0
            %1133 = vmatpush1.msra.mxu0 0.0
            %1134 = vmatprep.subr.mxu0 0.0
            %1135 = vmatpush1.msra.mxu0 0.0
            %1136 = vmatprep.subr.mxu0 0.0
            %1137 = vmatpush1.msra.mxu0 0.0
            %1138 = vmatprep.subr.mxu0 0.0
            %1139 = vmatpush1.msra.mxu0 0.0
            %1140 = vmatprep.subr.mxu0 0.0
            %1141 = vmatpush1.msra.mxu0 0.0
            %1142 = vmatprep.subr.mxu0 0.0
            %1143 = vmatpush1.msra.mxu0 0.0
            %1144 = vmatprep.subr.mxu0 0.0
            %1145 = vmatpush1.msra.mxu0 0.0
            %1146 = vmatprep.subr.mxu0 0.0
            %1147 = vmatpush1.msra.mxu0 0.0
            %1148 = vmatprep.subr.mxu0 0.0
            %1149 = vmatpush1.msra.mxu0 0.0
            %1150 = vmatprep.subr.mxu0 0.0
            %1151 = vmatpush1.msra.mxu0 0.0
            %1152 = vmatprep.subr.mxu0 0.0
            %1153 = vmatpush1.msra.mxu0 0.0
            %1154 = vmatprep.mubr.f32.mxu0 0.0
            %v1155 = vand.u32 %v849, 4294901760
            %v1156 = vsub.f32 %v849, %v1155
            %v1157 = vand.u32 %v1156, 4294901760
            %1158 = vmatmul.mubr.f32.gmra.mrb[0].mxu0 %v1157
            %v1159 = vpop.f32.mrb[0].mxu0
            %v1160 = vadd.f32 %v1084, %v1159
            %v1161 = vpop.f32.mrb[0].mxu0
            %v1162 = vadd.f32 %v1086, %v1161
            %1163 = vdwg.mxu0
            %v1164 = vand.u32 %v829, 4294901760
            %v1165 = vsub.f32 %v829, %v1164
            %v1166 = vand.u32 %v1165, 4294901760
            %1167 = vmatprep.subr.mxu0 %v1166
            %v1168 = vand.u32 %v828, 4294901760
            %v1169 = vsub.f32 %v828, %v1168
            %v1170 = vand.u32 %v1169, 4294901760
            %1171 = vmatpush1.msra.mxu0 %v1170
            %1172 = vmatprep.subr.mxu0 0.0
            %1173 = vmatpush1.msra.mxu0 0.0
            %1174 = vmatprep.subr.mxu0 0.0
            %1175 = vmatpush1.msra.mxu0 0.0
            %1176 = vmatprep.subr.mxu0 0.0
            %1177 = vmatpush1.msra.mxu0 0.0
            %1178 = vmatprep.subr.mxu0 0.0
            %1179 = vmatpush1.msra.mxu0 0.0
            %1180 = vmatprep.subr.mxu0 0.0
            %1181 = vmatpush1.msra.mxu0 0.0
            %1182 = vmatprep.subr.mxu0 0.0
            %1183 = vmatpush1.msra.mxu0 0.0
            %1184 = vmatprep.subr.mxu0 0.0
            %1185 = vmatpush1.msra.mxu0 0.0
            %1186 = vmatprep.subr.mxu0 0.0
            %1187 = vmatpush1.msra.mxu0 0.0
            %1188 = vmatprep.subr.mxu0 0.0
            %1189 = vmatpush1.msra.mxu0 0.0
            %1190 = vmatprep.subr.mxu0 0.0
            %1191 = vmatpush1.msra.mxu0 0.0
            %1192 = vmatprep.subr.mxu0 0.0
            %1193 = vmatpush1.msra.mxu0 0.0
            %1194 = vmatprep.subr.mxu0 0.0
            %1195 = vmatpush1.msra.mxu0 0.0
            %1196 = vmatprep.subr.mxu0 0.0
            %1197 = vmatpush1.msra.mxu0 0.0
            %1198 = vmatprep.subr.mxu0 0.0
            %1199 = vmatpush1.msra.mxu0 0.0
            %1200 = vmatprep.subr.mxu0 0.0
            %1201 = vmatpush1.msra.mxu0 0.0
            %1202 = vmatprep.subr.mxu0 0.0
            %1203 = vmatpush1.msra.mxu0 0.0
            %1204 = vmatprep.subr.mxu0 0.0
            %1205 = vmatpush1.msra.mxu0 0.0
            %1206 = vmatprep.subr.mxu0 0.0
            %1207 = vmatpush1.msra.mxu0 0.0
            %1208 = vmatprep.subr.mxu0 0.0
            %1209 = vmatpush1.msra.mxu0 0.0
            %1210 = vmatprep.subr.mxu0 0.0
            %1211 = vmatpush1.msra.mxu0 0.0
            %1212 = vmatprep.subr.mxu0 0.0
            %1213 = vmatpush1.msra.mxu0 0.0
            %1214 = vmatprep.subr.mxu0 0.0
            %1215 = vmatpush1.msra.mxu0 0.0
            %1216 = vmatprep.subr.mxu0 0.0
            %1217 = vmatpush1.msra.mxu0 0.0
            %1218 = vmatprep.subr.mxu0 0.0
            %1219 = vmatpush1.msra.mxu0 0.0
            %1220 = vmatprep.subr.mxu0 0.0
            %1221 = vmatpush1.msra.mxu0 0.0
            %1222 = vmatprep.subr.mxu0 0.0
            %1223 = vmatpush1.msra.mxu0 0.0
            %1224 = vmatprep.subr.mxu0 0.0
            %1225 = vmatpush1.msra.mxu0 0.0
            %1226 = vmatprep.subr.mxu0 0.0
            %1227 = vmatpush1.msra.mxu0 0.0
            %1228 = vmatprep.subr.mxu0 0.0
            %1229 = vmatpush1.msra.mxu0 0.0
            %1230 = vmatprep.subr.mxu0 0.0
            %1231 = vmatpush1.msra.mxu0 0.0
            %1232 = vmatprep.subr.mxu0 0.0
            %1233 = vmatpush1.msra.mxu0 0.0
            %1234 = vmatprep.mubr.f32.mxu0 0.0
            %v1235 = vand.u32 %v849, 4294901760
            %1236 = vmatmul.mubr.f32.gmra.mrb[0].mxu0 %v1235
            %v1237 = vpop.f32.mrb[0].mxu0
            %v1238 = vadd.f32 %v1160, %v1237
            %v1239 = vpop.f32.mrb[0].mxu0
            %v1240 = vadd.f32 %v1162, %v1239
            %1241 = vdwg.mxu0
            %v1242 = vand.u32 %v829, 4294901760
            %1243 = vmatprep.subr.mxu0 %v1242
            %v1244 = vand.u32 %v828, 4294901760
            %1245 = vmatpush1.msra.mxu0 %v1244
            %1246 = vmatprep.subr.mxu0 0.0
            %1247 = vmatpush1.msra.mxu0 0.0
            %1248 = vmatprep.subr.mxu0 0.0
            %1249 = vmatpush1.msra.mxu0 0.0
            %1250 = vmatprep.subr.mxu0 0.0
            %1251 = vmatpush1.msra.mxu0 0.0
            %1252 = vmatprep.subr.mxu0 0.0
            %1253 = vmatpush1.msra.mxu0 0.0
            %1254 = vmatprep.subr.mxu0 0.0
            %1255 = vmatpush1.msra.mxu0 0.0
            %1256 = vmatprep.subr.mxu0 0.0
            %1257 = vmatpush1.msra.mxu0 0.0
            %1258 = vmatprep.subr.mxu0 0.0
            %1259 = vmatpush1.msra.mxu0 0.0
            %1260 = vmatprep.subr.mxu0 0.0
            %1261 = vmatpush1.msra.mxu0 0.0
            %1262 = vmatprep.subr.mxu0 0.0
            %1263 = vmatpush1.msra.mxu0 0.0
            %1264 = vmatprep.subr.mxu0 0.0
            %1265 = vmatpush1.msra.mxu0 0.0
            %1266 = vmatprep.subr.mxu0 0.0
            %1267 = vmatpush1.msra.mxu0 0.0
            %1268 = vmatprep.subr.mxu0 0.0
            %1269 = vmatpush1.msra.mxu0 0.0
            %1270 = vmatprep.subr.mxu0 0.0
            %1271 = vmatpush1.msra.mxu0 0.0
            %1272 = vmatprep.subr.mxu0 0.0
            %1273 = vmatpush1.msra.mxu0 0.0
            %1274 = vmatprep.subr.mxu0 0.0
            %1275 = vmatpush1.msra.mxu0 0.0
            %1276 = vmatprep.subr.mxu0 0.0
            %1277 = vmatpush1.msra.mxu0 0.0
            %1278 = vmatprep.subr.mxu0 0.0
            %1279 = vmatpush1.msra.mxu0 0.0
            %1280 = vmatprep.subr.mxu0 0.0
            %1281 = vmatpush1.msra.mxu0 0.0
            %1282 = vmatprep.subr.mxu0 0.0
            %1283 = vmatpush1.msra.mxu0 0.0
            %1284 = vmatprep.subr.mxu0 0.0
            %1285 = vmatpush1.msra.mxu0 0.0
            %1286 = vmatprep.subr.mxu0 0.0
            %1287 = vmatpush1.msra.mxu0 0.0
            %1288 = vmatprep.subr.mxu0 0.0
            %1289 = vmatpush1.msra.mxu0 0.0
            %1290 = vmatprep.subr.mxu0 0.0
            %1291 = vmatpush1.msra.mxu0 0.0
            %1292 = vmatprep.subr.mxu0 0.0
            %1293 = vmatpush1.msra.mxu0 0.0
            %1294 = vmatprep.subr.mxu0 0.0
            %1295 = vmatpush1.msra.mxu0 0.0
            %1296 = vmatprep.subr.mxu0 0.0
            %1297 = vmatpush1.msra.mxu0 0.0
            %1298 = vmatprep.subr.mxu0 0.0
            %1299 = vmatpush1.msra.mxu0 0.0
            %1300 = vmatprep.subr.mxu0 0.0
            %1301 = vmatpush1.msra.mxu0 0.0
            %1302 = vmatprep.subr.mxu0 0.0
            %1303 = vmatpush1.msra.mxu0 0.0
            %1304 = vmatprep.subr.mxu0 0.0
            %1305 = vmatpush1.msra.mxu0 0.0
            %1306 = vmatprep.subr.mxu0 0.0
            %1307 = vmatpush1.msra.mxu0 0.0
            %1308 = vmatprep.mubr.f32.mxu0 0.0
            %v1309 = vand.u32 %v849, 4294901760
            %1310 = vmatmul.mubr.f32.gmra.mrb[0].mxu0 %v1309
            %v1311 = vpop.f32.mrb[0].mxu0
            %v1312 = vadd.f32 %v1238, %v1311
            %v1313 = vpop.f32.mrb[0].mxu0
            %v1314 = vadd.f32 %v1240, %v1313
            %1315 = vdwg.mxu0
            %v1316 = vstv %s835
            %v1317 = vmul.f32 %v1316, %v805
            %v1318 = vmul.f32 %v1316, %v806
            %v1319 = vadd.f32 %v818, %v1317
            %v1320 = vadd.f32 %v819, %v1318
            %v1321 = vstv %s837
            %v1322 = vmul.f32 %v1321, %v815
            %v1323 = vmul.f32 %v1321, %v816
            %v1324 = vadd.f32 %v1319, %v1322
            %v1325 = vadd.f32 %v1320, %v1323
            %v1326 = vstv %s839
            %v1327 = vmul.f32 %v1326, %v1312
            %v1328 = vmul.f32 %v1326, %v1314
            %v1329 = vadd.f32 %v1324, %v1327
            %v1330 = vadd.f32 %v1325, %v1328
            %1331 = vst [vmem:[%s290] sm:$0xff] %v1329
            %1332 = vst [vmem:[%s290 + $0x8] sm:$0xff] %v1330
            %1333 = vst [vmem:[%s809] sm:$0xff] %v1312
            %1334 = vst [vmem:[%s809 + $0x8] sm:$0xff] %v1314
          $region52: #{_sample_impl.1} parent=47 // pred_fallthru
            _
          %p1335 = scmp.eq.s32.totalorder %s23, 6
          // Predicated region
          $region53: #{_sample_impl.1} parent=47 // pred_check
            %p1336 = pneg %p1335
          $region54: #{_sample_impl.1} parent=47 // pred_check_branch
            %1338 = sbr.rel (%p1336) target = $region56
          $region55: #{_sample_impl.1} parent=47 // pred_region
            %v1339 = vmax.f32 %v828, -1.0
            %v1340 = vmax.f32 %v829, -1.0
            %v1341 = vmin.f32 %v1339, 1.0
            %v1342 = vmin.f32 %v1340, 1.0
            %1343 = vst [vmem:[%s290] sm:$0xff] %v1341
            %1344 = vst [vmem:[%s290 + $0x8] sm:$0xff] %v1342
          $region56: #{_sample_impl.1} parent=47 // pred_fallthru
            _
        $region48: #{_sample_impl.1} parent=35 // pred_fallthru
          _
        %s1345 = smul.u32 2, %s22
        %p1346 = scmp.lt.s32.totalorder %s21, 1
        %s1347 = scalar_select %p1346, %s21, 1
        %p1348 = scmp.lt.s32.totalorder %s1345, 1
        %s1349 = scalar_select %p1348, %s1345, 1
        %s1350 = smul.addr %s1347, 2
        %s1351 = sadd.s32 %s1349, %s1350
        %s1352 = smul.addr %s1351, 8
        %s1353 = scalar_lea.vmem %s4, %s1352
        // Predicated region
        $region57: #{_sample_impl.1} parent=35 // pred_check
          %p1354 = pneg %p156
        $region58: #{_sample_impl.1} parent=35 // pred_check_branch
          %1356 = sbr.rel (%p1354) target = $region60
        $region59: #{_sample_impl.1} parent=35 // pred_region
          %s1357 = smul.u32 2, %s22
        $region60: #{_sample_impl.1} parent=35 // pred_fallthru
          _
      $region36: #{_sample_impl.1} parent=5 // pred_fallthru
        _
      %p1358 = scmp.le.s32.totalorder 2, %s11
      // Predicated region
      $region61: #{_sample_impl.1} parent=5 // pred_check
        %p1359 = pneg %p1358
      $region62: #{_sample_impl.1} parent=5 // pred_check_branch
        %1361 = sbr.rel (%p1359) target = $region64
      $region63: #{_sample_impl.1} parent=5 // pred_region
        %s1362 = ssub.s32 %s11, 2
        // Predicated region
        $region65: #{_sample_impl.1} parent=63 // pred_check
          %p1363 = pneg %p162
        $region66: #{_sample_impl.1} parent=63 // pred_check_branch
          %1365 = sbr.rel (%p1363) target = $region68
        $region67: #{_sample_impl.1} parent=63 // pred_region
          %s1366 = smul.u32 2, %s25
          %p1367 = scmp.lt.s32.totalorder %s24, 1
          %s1368 = scalar_select %p1367, %s24, 1
          %p1369 = scmp.lt.s32.totalorder %s1366, 1
          %s1370 = scalar_select %p1369, %s1366, 1
          %s1371 = smul.addr %s1368, 2
          %s1372 = sadd.s32 %s1370, %s1371
          %s1373 = smul.addr %s1372, 8
          %s1374 = scalar_lea.vmem %s4, %s1373
        $region68: #{_sample_impl.1} parent=63 // pred_fallthru
          _
      $region64: #{_sample_impl.1} parent=5 // pred_fallthru
        _
    $region6: #{_sample_impl.1} parent=1 // loop_footer
      %s15 = sadd.s32 1, %s11
    $region7: #{_sample_impl.1} parent=1 // loop_footer_branch
      %10 = sbr.rel target = $region3
    $region8: #{_sample_impl.1} parent=1 // loop_exit
      _
    %1375 = vsyncpa [#allocation4], 1
    %s1376 = scalar_lea.sflag [#allocation4], 1
    %1377 = vsyncpa %s1376, 1

</llo_original>
